<compile_context>
chip_gen: v7x
topology: tpu7x:2x2x1
jax: 0.10.0
libtpu: 0.0.40
codegen_flags: <defaults>
</compile_context>

<pallas_src>
import math
import functools

import jax
import jax.numpy as jnp
from jax import lax
from jax.experimental import pallas as pl
from jax.experimental.pallas import tpu as pltpu


def encoder_mlp_kernel(x_ref, xavg_ref, w_ref, b_ref, o_ref, *, scale, n_mlp):
    """Single invocation: unrolled loop over the n_mlp layers, activation kept in vregs."""
    pos = math.sqrt(2.0)
    neg = 0.2 * math.sqrt(2.0)

    # (x - x_avg), computed once; x_avg is (1, dim) and broadcasts over batch.
    h0 = x_ref[...] - xavg_ref[...]

    def layer(l, h):
        # Weight tile loaded right before its dot -> bounds live range (no hoist/spill).
        w = w_ref[l]                                       # (dim, dim) VMEM tile
        y = jnp.dot(h, w,
                    preferred_element_type=jnp.float32,
                    precision=lax.Precision.HIGHEST)       # explicit f32-fidelity MXU path
        # Scalar `scale` moved onto the (batch, dim) output (16x less VALU work than
        # scaling the weight); bias is a (1, dim) tile with lr_mul already folded in.
        y = y * scale + b_ref[l]
        # fused_leaky_relu: leaky_relu(y, 0.2) * sqrt(2), constants fused.
        return y * jnp.where(y >= 0.0, pos, neg)

    h = lax.fori_loop(0, n_mlp, layer, h0, unroll=True)
    o_ref[...] = h.astype(o_ref.dtype)


def prepare_encoder_mlp_params(weights, biases, lr_mul):
    """One-time parameter prep (NOT per-call work).

    weights: (n_mlp, out_dim, in_dim) as in PyTorch EqualLinear.weight
    biases:  (n_mlp, out_dim)
    Returns (weights_t, biases_scaled) with
      weights_t:     (n_mlp, in_dim, out_dim)   -- pre-transposed so y = x @ W
      biases_scaled: (n_mlp, 1, out_dim)        -- lr_mul folded in, lane-native 2-D tile
    """
    weights_t = jnp.transpose(weights, (0, 2, 1))
    biases_scaled = (biases * lr_mul)[:, None, :]
    return weights_t, biases_scaled


def encoder_mlp(x, x_avg, weights_t, biases_scaled, lr_mul):
    """x: (batch, dim), x_avg: (1, dim), weights_t: (n_mlp, dim, dim) [already W.T],
    biases_scaled: (n_mlp, 1, dim) [bias * lr_mul pre-folded]."""
    batch, dim = x.shape
    n_mlp = weights_t.shape[0]
    scale = (1.0 / math.sqrt(dim)) * lr_mul

    kernel = functools.partial(encoder_mlp_kernel, scale=scale, n_mlp=n_mlp)

    flops = 2 * batch * dim * dim * n_mlp
    bytes_accessed = 4 * (n_mlp * dim * dim      # weights
                          + 2 * batch * dim      # x in, out
                          + n_mlp * dim          # biases
                          + dim)                 # x_avg

    vmem = pltpu.MemorySpace.VMEM
    return pl.pallas_call(
        kernel,
        out_shape=jax.ShapeDtypeStruct((batch, dim), jnp.float32),
        in_specs=[
            pl.BlockSpec(memory_space=vmem),  # x              (batch, dim)
            pl.BlockSpec(memory_space=vmem),  # x_avg          (1, dim)
            pl.BlockSpec(memory_space=vmem),  # weights_t      (n_mlp, dim, dim) — 256 KiB f32
            pl.BlockSpec(memory_space=vmem),  # biases_scaled  (n_mlp, 1, dim)
        ],
        out_specs=pl.BlockSpec(memory_space=vmem),
        cost_estimate=pl.CostEstimate(
            flops=flops, bytes_accessed=bytes_accessed, transcendentals=0),
    )(x, x_avg, weights_t, biases_scaled)


def encoder_mlp_ref(x, x_avg, weights_t, biases, lr_mul):
    """Pure-JAX f32 reference of the PyTorch forward (original op ordering)."""
    dim = x.shape[-1]
    scale = (1.0 / math.sqrt(dim)) * lr_mul
    h = x - x_avg
    for l in range(weights_t.shape[0]):
        h = jnp.dot(h, weights_t[l] * scale,
                    precision=lax.Precision.HIGHEST) + biases[l] * lr_mul
        h = jnp.where(h >= 0.0, h, 0.2 * h) * math.sqrt(2.0)
    return h


if __name__ == "__main__":
    # Small shapes consistent with EncoderMlp(dim, n_mlp): dim=128, n_mlp=4, batch=8.
    # (For production, batch >= 128 rows per call amortizes launch + weight-load latency.)
    batch, dim, n_mlp = 8, 128, 4
    lr_mlp = 0.01

    key = jax.random.PRNGKey(0)
    kx, kavg, kw = jax.random.split(key, 3)

    x = jax.random.normal(kx, (batch, dim), dtype=jnp.float32)
    x_avg = jax.random.normal(kavg, (1, dim), dtype=jnp.float32)

    # EqualLinear init: weight = randn(out, in) / lr_mul ; bias = zeros (bias_init=0).
    weights = jax.random.normal(kw, (n_mlp, dim, dim), dtype=jnp.float32) / lr_mlp
    biases = jnp.zeros((n_mlp, dim), dtype=jnp.float32)

    # One-time parameter prep (transpose + fold lr_mul into bias).
    weights_t, biases_scaled = prepare_encoder_mlp_params(weights, biases, lr_mlp)

    out = encoder_mlp(x, x_avg, weights_t, biases_scaled, lr_mlp)
    out = jax.block_until_ready(out)

    ref = encoder_mlp_ref(x, x_avg, weights_t, biases, lr_mlp)
    assert out.shape == (batch, dim)
    assert jnp.allclose(out, ref, atol=1e-3, rtol=1e-3), "mismatch vs pure-JAX reference"

    print("KERNEL_OK")
</pallas_src>

<mosaic_0001>
module attributes {stable_mosaic.version = 11 : i64} {
  func.func @encoder_mlp_kernel(%arg0: memref<8x128xf32, #tpu.memory_space<vmem>>, %arg1: memref<1x128xf32, #tpu.memory_space<vmem>>, %arg2: memref<4x128x128xf32, #tpu.memory_space<vmem>>, %arg3: memref<4x1x128xf32, #tpu.memory_space<vmem>>, %arg4: memref<8x128xf32, #tpu.memory_space<vmem>>) attributes {dimension_semantics = [], scalar_prefetch = 0 : i64, scratch_operands = 0 : i64, tpu.core_type = #tpu.core_type<tc>} {
    %c0 = arith.constant 0 : index
    %c0_0 = arith.constant 0 : index
    %0 = vector.load %arg0[%c0, %c0_0] : memref<8x128xf32, #tpu.memory_space<vmem>>, vector<8x128xf32>
    %c0_1 = arith.constant 0 : index
    %c0_2 = arith.constant 0 : index
    %1 = vector.load %arg1[%c0_1, %c0_2] : memref<1x128xf32, #tpu.memory_space<vmem>>, vector<1x128xf32>
    %2 = vector.broadcast %1 : vector<1x128xf32> to vector<8x128xf32>
    %3 = arith.subf %0, %2 : vector<8x128xf32>
    %c0_i32 = arith.constant 0 : i32
    %4 = arith.index_cast %c0_i32 : i32 to index
    %c0_3 = arith.constant 0 : index
    %c0_4 = arith.constant 0 : index
    %5 = vector.load %arg2[%4, %c0_3, %c0_4] : memref<4x128x128xf32, #tpu.memory_space<vmem>>, vector<1x128x128xf32>
    %6 = vector.shape_cast %5 : vector<1x128x128xf32> to vector<128x128xf32>
    %cst = arith.constant dense<0.000000e+00> : vector<8x128xf32>
    %7 = tpu.matmul %3, %6, %cst {dimension_numbers = #tpu.dot_dimension_numbers<[1], [0], [0], [1], [0, 0, 1, 1], [], []>, precision = #tpu.contract_precision<fp32>} : vector<8x128xf32>, vector<128x128xf32>, vector<8x128xf32> -> vector<8x128xf32>
    %cst_5 = arith.constant 8.83883447E-4 : f32
    %8 = vector.broadcast %cst_5 : f32 to vector<8x128xf32>
    %9 = arith.mulf %7, %8 : vector<8x128xf32>
    %10 = arith.index_cast %c0_i32 : i32 to index
    %c0_6 = arith.constant 0 : index
    %c0_7 = arith.constant 0 : index
    %11 = vector.load %arg3[%10, %c0_6, %c0_7] : memref<4x1x128xf32, #tpu.memory_space<vmem>>, vector<1x1x128xf32>
    %12 = vector.shape_cast %11 : vector<1x1x128xf32> to vector<1x128xf32>
    %13 = vector.broadcast %12 : vector<1x128xf32> to vector<8x128xf32>
    %14 = arith.addf %9, %13 : vector<8x128xf32>
    %cst_8 = arith.constant 0.000000e+00 : f32
    %15 = vector.broadcast %cst_8 : f32 to vector<8x128xf32>
    %16 = arith.cmpf oge, %14, %15 : vector<8x128xf32>
    %cst_9 = arith.constant 1.41421354 : f32
    %cst_10 = arith.constant 0.282842726 : f32
    %17 = vector.broadcast %cst_9 : f32 to vector<8x128xf32>
    %18 = vector.broadcast %cst_10 : f32 to vector<8x128xf32>
    %19 = arith.select %16, %17, %18 : vector<8x128xi1>, vector<8x128xf32>
    %20 = arith.mulf %14, %19 : vector<8x128xf32>
    %c1_i32 = arith.constant 1 : i32
    %21 = arith.index_cast %c1_i32 : i32 to index
    %c0_11 = arith.constant 0 : index
    %c0_12 = arith.constant 0 : index
    %22 = vector.load %arg2[%21, %c0_11, %c0_12] : memref<4x128x128xf32, #tpu.memory_space<vmem>>, vector<1x128x128xf32>
    %23 = vector.shape_cast %22 : vector<1x128x128xf32> to vector<128x128xf32>
    %cst_13 = arith.constant dense<0.000000e+00> : vector<8x128xf32>
    %24 = tpu.matmul %20, %23, %cst_13 {dimension_numbers = #tpu.dot_dimension_numbers<[1], [0], [0], [1], [0, 0, 1, 1], [], []>, precision = #tpu.contract_precision<fp32>} : vector<8x128xf32>, vector<128x128xf32>, vector<8x128xf32> -> vector<8x128xf32>
    %cst_14 = arith.constant 8.83883447E-4 : f32
    %25 = vector.broadcast %cst_14 : f32 to vector<8x128xf32>
    %26 = arith.mulf %24, %25 : vector<8x128xf32>
    %27 = arith.index_cast %c1_i32 : i32 to index
    %c0_15 = arith.constant 0 : index
    %c0_16 = arith.constant 0 : index
    %28 = vector.load %arg3[%27, %c0_15, %c0_16] : memref<4x1x128xf32, #tpu.memory_space<vmem>>, vector<1x1x128xf32>
    %29 = vector.shape_cast %28 : vector<1x1x128xf32> to vector<1x128xf32>
    %30 = vector.broadcast %29 : vector<1x128xf32> to vector<8x128xf32>
    %31 = arith.addf %26, %30 : vector<8x128xf32>
    %cst_17 = arith.constant 0.000000e+00 : f32
    %32 = vector.broadcast %cst_17 : f32 to vector<8x128xf32>
    %33 = arith.cmpf oge, %31, %32 : vector<8x128xf32>
    %cst_18 = arith.constant 1.41421354 : f32
    %cst_19 = arith.constant 0.282842726 : f32
    %34 = vector.broadcast %cst_18 : f32 to vector<8x128xf32>
    %35 = vector.broadcast %cst_19 : f32 to vector<8x128xf32>
    %36 = arith.select %33, %34, %35 : vector<8x128xi1>, vector<8x128xf32>
    %37 = arith.mulf %31, %36 : vector<8x128xf32>
    %c2_i32 = arith.constant 2 : i32
    %38 = arith.index_cast %c2_i32 : i32 to index
    %c0_20 = arith.constant 0 : index
    %c0_21 = arith.constant 0 : index
    %39 = vector.load %arg2[%38, %c0_20, %c0_21] : memref<4x128x128xf32, #tpu.memory_space<vmem>>, vector<1x128x128xf32>
    %40 = vector.shape_cast %39 : vector<1x128x128xf32> to vector<128x128xf32>
    %cst_22 = arith.constant dense<0.000000e+00> : vector<8x128xf32>
    %41 = tpu.matmul %37, %40, %cst_22 {dimension_numbers = #tpu.dot_dimension_numbers<[1], [0], [0], [1], [0, 0, 1, 1], [], []>, precision = #tpu.contract_precision<fp32>} : vector<8x128xf32>, vector<128x128xf32>, vector<8x128xf32> -> vector<8x128xf32>
    %cst_23 = arith.constant 8.83883447E-4 : f32
    %42 = vector.broadcast %cst_23 : f32 to vector<8x128xf32>
    %43 = arith.mulf %41, %42 : vector<8x128xf32>
    %44 = arith.index_cast %c2_i32 : i32 to index
    %c0_24 = arith.constant 0 : index
    %c0_25 = arith.constant 0 : index
    %45 = vector.load %arg3[%44, %c0_24, %c0_25] : memref<4x1x128xf32, #tpu.memory_space<vmem>>, vector<1x1x128xf32>
    %46 = vector.shape_cast %45 : vector<1x1x128xf32> to vector<1x128xf32>
    %47 = vector.broadcast %46 : vector<1x128xf32> to vector<8x128xf32>
    %48 = arith.addf %43, %47 : vector<8x128xf32>
    %cst_26 = arith.constant 0.000000e+00 : f32
    %49 = vector.broadcast %cst_26 : f32 to vector<8x128xf32>
    %50 = arith.cmpf oge, %48, %49 : vector<8x128xf32>
    %cst_27 = arith.constant 1.41421354 : f32
    %cst_28 = arith.constant 0.282842726 : f32
    %51 = vector.broadcast %cst_27 : f32 to vector<8x128xf32>
    %52 = vector.broadcast %cst_28 : f32 to vector<8x128xf32>
    %53 = arith.select %50, %51, %52 : vector<8x128xi1>, vector<8x128xf32>
    %54 = arith.mulf %48, %53 : vector<8x128xf32>
    %c3_i32 = arith.constant 3 : i32
    %55 = arith.index_cast %c3_i32 : i32 to index
    %c0_29 = arith.constant 0 : index
    %c0_30 = arith.constant 0 : index
    %56 = vector.load %arg2[%55, %c0_29, %c0_30] : memref<4x128x128xf32, #tpu.memory_space<vmem>>, vector<1x128x128xf32>
    %57 = vector.shape_cast %56 : vector<1x128x128xf32> to vector<128x128xf32>
    %cst_31 = arith.constant dense<0.000000e+00> : vector<8x128xf32>
    %58 = tpu.matmul %54, %57, %cst_31 {dimension_numbers = #tpu.dot_dimension_numbers<[1], [0], [0], [1], [0, 0, 1, 1], [], []>, precision = #tpu.contract_precision<fp32>} : vector<8x128xf32>, vector<128x128xf32>, vector<8x128xf32> -> vector<8x128xf32>
    %cst_32 = arith.constant 8.83883447E-4 : f32
    %59 = vector.broadcast %cst_32 : f32 to vector<8x128xf32>
    %60 = arith.mulf %58, %59 : vector<8x128xf32>
    %61 = arith.index_cast %c3_i32 : i32 to index
    %c0_33 = arith.constant 0 : index
    %c0_34 = arith.constant 0 : index
    %62 = vector.load %arg3[%61, %c0_33, %c0_34] : memref<4x1x128xf32, #tpu.memory_space<vmem>>, vector<1x1x128xf32>
    %63 = vector.shape_cast %62 : vector<1x1x128xf32> to vector<1x128xf32>
    %64 = vector.broadcast %63 : vector<1x128xf32> to vector<8x128xf32>
    %65 = arith.addf %60, %64 : vector<8x128xf32>
    %cst_35 = arith.constant 0.000000e+00 : f32
    %66 = vector.broadcast %cst_35 : f32 to vector<8x128xf32>
    %67 = arith.cmpf oge, %65, %66 : vector<8x128xf32>
    %cst_36 = arith.constant 1.41421354 : f32
    %cst_37 = arith.constant 0.282842726 : f32
    %68 = vector.broadcast %cst_36 : f32 to vector<8x128xf32>
    %69 = vector.broadcast %cst_37 : f32 to vector<8x128xf32>
    %70 = arith.select %67, %68, %69 : vector<8x128xi1>, vector<8x128xf32>
    %71 = arith.mulf %65, %70 : vector<8x128xf32>
    %c4_i32 = arith.constant 4 : i32
    %c0_38 = arith.constant 0 : index
    %c0_39 = arith.constant 0 : index
    %72 = vector.load %arg4[%c0_38, %c0_39] : memref<8x128xf32, #tpu.memory_space<vmem>>, vector<8x128xf32>
    tpu.vector_store %arg4[%c0_38, %c0_39], %71 {strides = array<i32>} : memref<8x128xf32, #tpu.memory_space<vmem>>, vector<8x128xf32>,
    return
  }
}

</mosaic_0001>

<llo_original>
// kernel: tpu_custom_call.1
$region0: #{tpu_custom_call.1}
  #allocation0 [shape = 'u32[]', space=smem, size = 0x4, offset = 0x4, fixed_abs, tag = 'smem constant byte address 0x4 - core index']
  #allocation1 [shape = 'u32[144,128]{1,0:T(1,128)}', space=vmem, size = 0x12000, scoped, tag = 'internal scratch']
  %s0 = inlined_call_operand.hbm [shape: f32[8,128], index: 0, kind: input, shape index: {}]
  %s1 = inlined_call_operand.vmem [shape: f32[1,128], index: 1, kind: input, shape index: {}]
  %s2 = inlined_call_operand.hbm [shape: f32[4,128,128], index: 2, kind: input, shape index: {}]
  %s3 = inlined_call_operand.vmem [shape: f32[4,1,128], index: 3, kind: input, shape index: {}]
  %s4 = inlined_call_operand.hbm [shape: f32[8,128], index: 4, kind: output, shape index: {}]
  %s5 = sld [smem:[#allocation0]]
  $region34: #{tpu_custom_call.1} parent=0
    _
  %s7 = ssub.s32 1, %s5
  %s8 = scalar_select 0, %s7, %s5
  $region1: #{tpu_custom_call.1} parent=0
    #allocation2 [shape = 'u8[4096]{0}', space=vmem, size = 0x1000, scoped, tag = 'input window, operand 0, single buffered']
    #allocation3 [shape = 's32[1]{0}', space=sflag, size = 0x4, scoped, tag = 'scoped memory for tpu_custom_call.1']
    #allocation4 [shape = 's32[1]{0}', space=sflag, size = 0x4, scoped, tag = 'scoped memory for tpu_custom_call.1']
    #allocation5 [shape = 'u8[262144]{0}', space=vmem, size = 0x40000, scoped, tag = 'input window, operand 2, single buffered']
    #allocation6 [shape = 's32[1]{0}', space=sflag, size = 0x4, scoped, tag = 'scoped memory for tpu_custom_call.1']
    #allocation7 [shape = 'u8[4096]{0}', space=vmem, size = 0x1000, scoped, tag = 'output window, operand 0, single buffered']
    %9 = vsyncpa [#allocation3], 0
    %10 = vsyncpa [#allocation6], 0
    %11 = vsyncpa [#allocation4], 0
    // Predicated region
    $region2: #{tpu_custom_call.1} parent=1 // pred_check
      _
    $region3: #{tpu_custom_call.1} parent=1 // pred_check_branch
      %13 = sbr.rel (0) target = $region5
    $region4: #{tpu_custom_call.1} parent=1 // pred_region
      %s15 = ssub.s32 128, 128
      %16 = vsyncadd [#allocation3], %s15
      %s18 = sshll.u32 [#allocation2], 4
      %s19 = int_to_ptr.vmem [resolvable:$true] %s18
      %21 = dma.hbm_to_vmem [thread:$0]  %s0, 128, %s19, [#allocation3]
    $region5: #{tpu_custom_call.1} parent=1 // pred_fallthru
      _
    // Predicated region
    $region6: #{tpu_custom_call.1} parent=1 // pred_check
      _
    $region7: #{tpu_custom_call.1} parent=1 // pred_check_branch
      %23 = sbr.rel (0) target = $region9
    $region8: #{tpu_custom_call.1} parent=1 // pred_region
      _
    $region9: #{tpu_custom_call.1} parent=1 // pred_fallthru
      _
    // Predicated region
    $region10: #{tpu_custom_call.1} parent=1 // pred_check
      _
    $region11: #{tpu_custom_call.1} parent=1 // pred_check_branch
      %25 = sbr.rel (0) target = $region13
    $region12: #{tpu_custom_call.1} parent=1 // pred_region
      %s27 = ssub.s32 8192, 8192
      %28 = vsyncadd [#allocation6], %s27
      %s29 = sshll.u32 [#allocation5], 4
      %s30 = int_to_ptr.vmem [resolvable:$true] %s29
      %35 = dma.hbm_to_vmem [thread:$0]  %s2, 8192, %s30, [#allocation6], 128, 128, 8
    $region13: #{tpu_custom_call.1} parent=1 // pred_fallthru
      _
    // Predicated region
    $region14: #{tpu_custom_call.1} parent=1 // pred_check
      _
    $region15: #{tpu_custom_call.1} parent=1 // pred_check_branch
      %37 = sbr.rel (0) target = $region17
    $region16: #{tpu_custom_call.1} parent=1 // pred_region
      _
    $region17: #{tpu_custom_call.1} parent=1 // pred_fallthru
      _
    // Predicated region
    $region18: #{tpu_custom_call.1} parent=1 // pred_check
      _
    $region19: #{tpu_custom_call.1} parent=1 // pred_check_branch
      %39 = sbr.rel (0) target = $region21
    $region20: #{tpu_custom_call.1} parent=1 // pred_region
      %40 = dma.done [#allocation3], 128
    $region21: #{tpu_custom_call.1} parent=1 // pred_fallthru
      _
    // Predicated region
    $region22: #{tpu_custom_call.1} parent=1 // pred_check
      _
    $region23: #{tpu_custom_call.1} parent=1 // pred_check_branch
      %42 = sbr.rel (0) target = $region25
    $region24: #{tpu_custom_call.1} parent=1 // pred_region
      %43 = dma.done [#allocation6], 8192
    $region25: #{tpu_custom_call.1} parent=1 // pred_fallthru
      _
    %v44 = vld [vmem:[#allocation2] sm:$0xff]
    %v45 = vld [vmem:[%s1] sm:$0x1]
    %v47 = vlaneseq
    %v48 = vshrl.u32 %v47, 7
    %v49 = vsub.s32 0, %v48
    %v50 = vrot.slane %v45, %v49
    %v52 = vsub.f32 %v44, %v50
    %v53 = vld [vmem:[#allocation5] sm:$0xff]
    %v54 = vld [vmem:[#allocation5 + $0x8] sm:$0xff]
    %v55 = vld [vmem:[#allocation5 + $0x10] sm:$0xff]
    %v56 = vld [vmem:[#allocation5 + $0x18] sm:$0xff]
    %v57 = vld [vmem:[#allocation5 + $0x20] sm:$0xff]
    %v58 = vld [vmem:[#allocation5 + $0x28] sm:$0xff]
    %v59 = vld [vmem:[#allocation5 + $0x30] sm:$0xff]
    %v60 = vld [vmem:[#allocation5 + $0x38] sm:$0xff]
    %v61 = vld [vmem:[#allocation5 + $0x40] sm:$0xff]
    %v62 = vld [vmem:[#allocation5 + $0x48] sm:$0xff]
    %v63 = vld [vmem:[#allocation5 + $0x50] sm:$0xff]
    %v64 = vld [vmem:[#allocation5 + $0x58] sm:$0xff]
    %v65 = vld [vmem:[#allocation5 + $0x60] sm:$0xff]
    %v66 = vld [vmem:[#allocation5 + $0x68] sm:$0xff]
    %v67 = vld [vmem:[#allocation5 + $0x70] sm:$0xff]
    %v68 = vld [vmem:[#allocation5 + $0x78] sm:$0xff]
    %69 = vmatprep.subr.mxu0 0.0
    %v70 = vand.u32 %v53, 4294901760
    %71 = vmatpush1.msra.mxu0 %v70
    %72 = vmatprep.subr.mxu0 0.0
    %v73 = vand.u32 %v54, 4294901760
    %74 = vmatpush1.msra.mxu0 %v73
    %75 = vmatprep.subr.mxu0 0.0
    %v76 = vand.u32 %v55, 4294901760
    %77 = vmatpush1.msra.mxu0 %v76
    %78 = vmatprep.subr.mxu0 0.0
    %v79 = vand.u32 %v56, 4294901760
    %80 = vmatpush1.msra.mxu0 %v79
    %81 = vmatprep.subr.mxu0 0.0
    %v82 = vand.u32 %v57, 4294901760
    %83 = vmatpush1.msra.mxu0 %v82
    %84 = vmatprep.subr.mxu0 0.0
    %v85 = vand.u32 %v58, 4294901760
    %86 = vmatpush1.msra.mxu0 %v85
    %87 = vmatprep.subr.mxu0 0.0
    %v88 = vand.u32 %v59, 4294901760
    %89 = vmatpush1.msra.mxu0 %v88
    %90 = vmatprep.subr.mxu0 0.0
    %v91 = vand.u32 %v60, 4294901760
    %92 = vmatpush1.msra.mxu0 %v91
    %93 = vmatprep.subr.mxu0 0.0
    %v94 = vand.u32 %v61, 4294901760
    %95 = vmatpush1.msra.mxu0 %v94
    %96 = vmatprep.subr.mxu0 0.0
    %v97 = vand.u32 %v62, 4294901760
    %98 = vmatpush1.msra.mxu0 %v97
    %99 = vmatprep.subr.mxu0 0.0
    %v100 = vand.u32 %v63, 4294901760
    %101 = vmatpush1.msra.mxu0 %v100
    %102 = vmatprep.subr.mxu0 0.0
    %v103 = vand.u32 %v64, 4294901760
    %104 = vmatpush1.msra.mxu0 %v103
    %105 = vmatprep.subr.mxu0 0.0
    %v106 = vand.u32 %v65, 4294901760
    %107 = vmatpush1.msra.mxu0 %v106
    %108 = vmatprep.subr.mxu0 0.0
    %v109 = vand.u32 %v66, 4294901760
    %110 = vmatpush1.msra.mxu0 %v109
    %111 = vmatprep.subr.mxu0 0.0
    %v112 = vand.u32 %v67, 4294901760
    %113 = vmatpush1.msra.mxu0 %v112
    %114 = vmatprep.subr.mxu0 0.0
    %v115 = vand.u32 %v68, 4294901760
    %116 = vmatpush1.msra.mxu0 %v115
    %117 = vmatprep.subr.mxu0 0.0
    %118 = vmatpush1.msra.mxu0 0.0
    %119 = vmatprep.subr.mxu0 0.0
    %120 = vmatpush1.msra.mxu0 0.0
    %121 = vmatprep.subr.mxu0 0.0
    %122 = vmatpush1.msra.mxu0 0.0
    %123 = vmatprep.subr.mxu0 0.0
    %124 = vmatpush1.msra.mxu0 0.0
    %125 = vmatprep.subr.mxu0 0.0
    %126 = vmatpush1.msra.mxu0 0.0
    %127 = vmatprep.subr.mxu0 0.0
    %128 = vmatpush1.msra.mxu0 0.0
    %129 = vmatprep.subr.mxu0 0.0
    %130 = vmatpush1.msra.mxu0 0.0
    %131 = vmatprep.subr.mxu0 0.0
    %132 = vmatpush1.msra.mxu0 0.0
    %133 = vmatprep.subr.mxu0 0.0
    %134 = vmatpush1.msra.mxu0 0.0
    %135 = vmatprep.subr.mxu0 0.0
    %136 = vmatpush1.msra.mxu0 0.0
    %137 = vmatprep.subr.mxu0 0.0
    %138 = vmatpush1.msra.mxu0 0.0
    %139 = vmatprep.subr.mxu0 0.0
    %140 = vmatpush1.msra.mxu0 0.0
    %141 = vmatprep.subr.mxu0 0.0
    %142 = vmatpush1.msra.mxu0 0.0
    %143 = vmatprep.subr.mxu0 0.0
    %144 = vmatpush1.msra.mxu0 0.0
    %145 = vmatprep.subr.mxu0 0.0
    %146 = vmatpush1.msra.mxu0 0.0
    %147 = vmatprep.subr.mxu0 0.0
    %148 = vmatpush1.msra.mxu0 0.0
    %149 = vmatprep.mubr.f32.mxu0 0.0
    %v150 = vand.u32 %v52, 4294901760
    %v151 = vsub.f32 %v52, %v150
    %v152 = vand.u32 %v151, 4294901760
    %v153 = vsub.f32 %v151, %v152
    %v154 = vand.u32 %v153, 4294901760
    %155 = vmatmul.mubr.f32.gmra.mrb[0].mxu0 %v154
    %v156 = vpop.f32.mrb[0].mxu0
    %v157 = vadd.f32 0.0, %v156
    %v158 = vpop.f32.mrb[0].mxu0
    %159 = vdwg.mxu0
    %160 = vmatprep.subr.mxu0 0.0
    %v161 = vand.u32 %v53, 4294901760
    %v162 = vsub.f32 %v53, %v161
    %v163 = vand.u32 %v162, 4294901760
    %v164 = vsub.f32 %v162, %v163
    %v165 = vand.u32 %v164, 4294901760
    %166 = vmatpush1.msra.mxu0 %v165
    %167 = vmatprep.subr.mxu0 0.0
    %v168 = vand.u32 %v54, 4294901760
    %v169 = vsub.f32 %v54, %v168
    %v170 = vand.u32 %v169, 4294901760
    %v171 = vsub.f32 %v169, %v170
    %v172 = vand.u32 %v171, 4294901760
    %173 = vmatpush1.msra.mxu0 %v172
    %174 = vmatprep.subr.mxu0 0.0
    %v175 = vand.u32 %v55, 4294901760
    %v176 = vsub.f32 %v55, %v175
    %v177 = vand.u32 %v176, 4294901760
    %v178 = vsub.f32 %v176, %v177
    %v179 = vand.u32 %v178, 4294901760
    %180 = vmatpush1.msra.mxu0 %v179
    %181 = vmatprep.subr.mxu0 0.0
    %v182 = vand.u32 %v56, 4294901760
    %v183 = vsub.f32 %v56, %v182
    %v184 = vand.u32 %v183, 4294901760
    %v185 = vsub.f32 %v183, %v184
    %v186 = vand.u32 %v185, 4294901760
    %187 = vmatpush1.msra.mxu0 %v186
    %188 = vmatprep.subr.mxu0 0.0
    %v189 = vand.u32 %v57, 4294901760
    %v190 = vsub.f32 %v57, %v189
    %v191 = vand.u32 %v190, 4294901760
    %v192 = vsub.f32 %v190, %v191
    %v193 = vand.u32 %v192, 4294901760
    %194 = vmatpush1.msra.mxu0 %v193
    %195 = vmatprep.subr.mxu0 0.0
    %v196 = vand.u32 %v58, 4294901760
    %v197 = vsub.f32 %v58, %v196
    %v198 = vand.u32 %v197, 4294901760
    %v199 = vsub.f32 %v197, %v198
    %v200 = vand.u32 %v199, 4294901760
    %201 = vmatpush1.msra.mxu0 %v200
    %202 = vmatprep.subr.mxu0 0.0
    %v203 = vand.u32 %v59, 4294901760
    %v204 = vsub.f32 %v59, %v203
    %v205 = vand.u32 %v204, 4294901760
    %v206 = vsub.f32 %v204, %v205
    %v207 = vand.u32 %v206, 4294901760
    %208 = vmatpush1.msra.mxu0 %v207
    %209 = vmatprep.subr.mxu0 0.0
    %v210 = vand.u32 %v60, 4294901760
    %v211 = vsub.f32 %v60, %v210
    %v212 = vand.u32 %v211, 4294901760
    %v213 = vsub.f32 %v211, %v212
    %v214 = vand.u32 %v213, 4294901760
    %215 = vmatpush1.msra.mxu0 %v214
    %216 = vmatprep.subr.mxu0 0.0
    %v217 = vand.u32 %v61, 4294901760
    %v218 = vsub.f32 %v61, %v217
    %v219 = vand.u32 %v218, 4294901760
    %v220 = vsub.f32 %v218, %v219
    %v221 = vand.u32 %v220, 4294901760
    %222 = vmatpush1.msra.mxu0 %v221
    %223 = vmatprep.subr.mxu0 0.0
    %v224 = vand.u32 %v62, 4294901760
    %v225 = vsub.f32 %v62, %v224
    %v226 = vand.u32 %v225, 4294901760
    %v227 = vsub.f32 %v225, %v226
    %v228 = vand.u32 %v227, 4294901760
    %229 = vmatpush1.msra.mxu0 %v228
    %230 = vmatprep.subr.mxu0 0.0
    %v231 = vand.u32 %v63, 4294901760
    %v232 = vsub.f32 %v63, %v231
    %v233 = vand.u32 %v232, 4294901760
    %v234 = vsub.f32 %v232, %v233
    %v235 = vand.u32 %v234, 4294901760
    %236 = vmatpush1.msra.mxu0 %v235
    %237 = vmatprep.subr.mxu0 0.0
    %v238 = vand.u32 %v64, 4294901760
    %v239 = vsub.f32 %v64, %v238
    %v240 = vand.u32 %v239, 4294901760
    %v241 = vsub.f32 %v239, %v240
    %v242 = vand.u32 %v241, 4294901760
    %243 = vmatpush1.msra.mxu0 %v242
    %244 = vmatprep.subr.mxu0 0.0
    %v245 = vand.u32 %v65, 4294901760
    %v246 = vsub.f32 %v65, %v245
    %v247 = vand.u32 %v246, 4294901760
    %v248 = vsub.f32 %v246, %v247
    %v249 = vand.u32 %v248, 4294901760
    %250 = vmatpush1.msra.mxu0 %v249
    %251 = vmatprep.subr.mxu0 0.0
    %v252 = vand.u32 %v66, 4294901760
    %v253 = vsub.f32 %v66, %v252
    %v254 = vand.u32 %v253, 4294901760
    %v255 = vsub.f32 %v253, %v254
    %v256 = vand.u32 %v255, 4294901760
    %257 = vmatpush1.msra.mxu0 %v256
    %258 = vmatprep.subr.mxu0 0.0
    %v259 = vand.u32 %v67, 4294901760
    %v260 = vsub.f32 %v67, %v259
    %v261 = vand.u32 %v260, 4294901760
    %v262 = vsub.f32 %v260, %v261
    %v263 = vand.u32 %v262, 4294901760
    %264 = vmatpush1.msra.mxu0 %v263
    %265 = vmatprep.subr.mxu0 0.0
    %v266 = vand.u32 %v68, 4294901760
    %v267 = vsub.f32 %v68, %v266
    %v268 = vand.u32 %v267, 4294901760
    %v269 = vsub.f32 %v267, %v268
    %v270 = vand.u32 %v269, 4294901760
    %271 = vmatpush1.msra.mxu0 %v270
    %272 = vmatprep.subr.mxu0 0.0
    %273 = vmatpush1.msra.mxu0 0.0
    %274 = vmatprep.subr.mxu0 0.0
    %275 = vmatpush1.msra.mxu0 0.0
    %276 = vmatprep.subr.mxu0 0.0
    %277 = vmatpush1.msra.mxu0 0.0
    %278 = vmatprep.subr.mxu0 0.0
    %279 = vmatpush1.msra.mxu0 0.0
    %280 = vmatprep.subr.mxu0 0.0
    %281 = vmatpush1.msra.mxu0 0.0
    %282 = vmatprep.subr.mxu0 0.0
    %283 = vmatpush1.msra.mxu0 0.0
    %284 = vmatprep.subr.mxu0 0.0
    %285 = vmatpush1.msra.mxu0 0.0
    %286 = vmatprep.subr.mxu0 0.0
    %287 = vmatpush1.msra.mxu0 0.0
    %288 = vmatprep.subr.mxu0 0.0
    %289 = vmatpush1.msra.mxu0 0.0
    %290 = vmatprep.subr.mxu0 0.0
    %291 = vmatpush1.msra.mxu0 0.0
    %292 = vmatprep.subr.mxu0 0.0
    %293 = vmatpush1.msra.mxu0 0.0
    %294 = vmatprep.subr.mxu0 0.0
    %295 = vmatpush1.msra.mxu0 0.0
    %296 = vmatprep.subr.mxu0 0.0
    %297 = vmatpush1.msra.mxu0 0.0
    %298 = vmatprep.subr.mxu0 0.0
    %299 = vmatpush1.msra.mxu0 0.0
    %300 = vmatprep.subr.mxu0 0.0
    %301 = vmatpush1.msra.mxu0 0.0
    %302 = vmatprep.subr.mxu0 0.0
    %303 = vmatpush1.msra.mxu0 0.0
    %304 = vmatprep.mubr.f32.mxu0 0.0
    %v305 = vand.u32 %v52, 4294901760
    %306 = vmatmul.mubr.f32.gmra.mrb[0].mxu0 %v305
    %v307 = vpop.f32.mrb[0].mxu0
    %v308 = vadd.f32 %v157, %v307
    %v309 = vpop.f32.mrb[0].mxu0
    %310 = vdwg.mxu0
    %311 = vmatprep.subr.mxu0 0.0
    %v312 = vand.u32 %v53, 4294901760
    %v313 = vsub.f32 %v53, %v312
    %314 = vmatpush1.msra.mxu0 %v313
    %315 = vmatprep.subr.mxu0 0.0
    %v316 = vand.u32 %v54, 4294901760
    %v317 = vsub.f32 %v54, %v316
    %318 = vmatpush1.msra.mxu0 %v317
    %319 = vmatprep.subr.mxu0 0.0
    %v320 = vand.u32 %v55, 4294901760
    %v321 = vsub.f32 %v55, %v320
    %322 = vmatpush1.msra.mxu0 %v321
    %323 = vmatprep.subr.mxu0 0.0
    %v324 = vand.u32 %v56, 4294901760
    %v325 = vsub.f32 %v56, %v324
    %326 = vmatpush1.msra.mxu0 %v325
    %327 = vmatprep.subr.mxu0 0.0
    %v328 = vand.u32 %v57, 4294901760
    %v329 = vsub.f32 %v57, %v328
    %330 = vmatpush1.msra.mxu0 %v329
    %331 = vmatprep.subr.mxu0 0.0
    %v332 = vand.u32 %v58, 4294901760
    %v333 = vsub.f32 %v58, %v332
    %334 = vmatpush1.msra.mxu0 %v333
    %335 = vmatprep.subr.mxu0 0.0
    %v336 = vand.u32 %v59, 4294901760
    %v337 = vsub.f32 %v59, %v336
    %338 = vmatpush1.msra.mxu0 %v337
    %339 = vmatprep.subr.mxu0 0.0
    %v340 = vand.u32 %v60, 4294901760
    %v341 = vsub.f32 %v60, %v340
    %342 = vmatpush1.msra.mxu0 %v341
    %343 = vmatprep.subr.mxu0 0.0
    %v344 = vand.u32 %v61, 4294901760
    %v345 = vsub.f32 %v61, %v344
    %346 = vmatpush1.msra.mxu0 %v345
    %347 = vmatprep.subr.mxu0 0.0
    %v348 = vand.u32 %v62, 4294901760
    %v349 = vsub.f32 %v62, %v348
    %350 = vmatpush1.msra.mxu0 %v349
    %351 = vmatprep.subr.mxu0 0.0
    %v352 = vand.u32 %v63, 4294901760
    %v353 = vsub.f32 %v63, %v352
    %354 = vmatpush1.msra.mxu0 %v353
    %355 = vmatprep.subr.mxu0 0.0
    %v356 = vand.u32 %v64, 4294901760
    %v357 = vsub.f32 %v64, %v356
    %358 = vmatpush1.msra.mxu0 %v357
    %359 = vmatprep.subr.mxu0 0.0
    %v360 = vand.u32 %v65, 4294901760
    %v361 = vsub.f32 %v65, %v360
    %362 = vmatpush1.msra.mxu0 %v361
    %363 = vmatprep.subr.mxu0 0.0
    %v364 = vand.u32 %v66, 4294901760
    %v365 = vsub.f32 %v66, %v364
    %366 = vmatpush1.msra.mxu0 %v365
    %367 = vmatprep.subr.mxu0 0.0
    %v368 = vand.u32 %v67, 4294901760
    %v369 = vsub.f32 %v67, %v368
    %370 = vmatpush1.msra.mxu0 %v369
    %371 = vmatprep.subr.mxu0 0.0
    %v372 = vand.u32 %v68, 4294901760
    %v373 = vsub.f32 %v68, %v372
    %374 = vmatpush1.msra.mxu0 %v373
    %375 = vmatprep.subr.mxu0 0.0
    %376 = vmatpush1.msra.mxu0 0.0
    %377 = vmatprep.subr.mxu0 0.0
    %378 = vmatpush1.msra.mxu0 0.0
    %379 = vmatprep.subr.mxu0 0.0
    %380 = vmatpush1.msra.mxu0 0.0
    %381 = vmatprep.subr.mxu0 0.0
    %382 = vmatpush1.msra.mxu0 0.0
    %383 = vmatprep.subr.mxu0 0.0
    %384 = vmatpush1.msra.mxu0 0.0
    %385 = vmatprep.subr.mxu0 0.0
    %386 = vmatpush1.msra.mxu0 0.0
    %387 = vmatprep.subr.mxu0 0.0
    %388 = vmatpush1.msra.mxu0 0.0
    %389 = vmatprep.subr.mxu0 0.0
    %390 = vmatpush1.msra.mxu0 0.0
    %391 = vmatprep.subr.mxu0 0.0
    %392 = vmatpush1.msra.mxu0 0.0
    %393 = vmatprep.subr.mxu0 0.0
    %394 = vmatpush1.msra.mxu0 0.0
    %395 = vmatprep.subr.mxu0 0.0
    %396 = vmatpush1.msra.mxu0 0.0
    %397 = vmatprep.subr.mxu0 0.0
    %398 = vmatpush1.msra.mxu0 0.0
    %399 = vmatprep.subr.mxu0 0.0
    %400 = vmatpush1.msra.mxu0 0.0
    %401 = vmatprep.subr.mxu0 0.0
    %402 = vmatpush1.msra.mxu0 0.0
    %403 = vmatprep.subr.mxu0 0.0
    %404 = vmatpush1.msra.mxu0 0.0
    %405 = vmatprep.subr.mxu0 0.0
    %406 = vmatpush1.msra.mxu0 0.0
    %407 = vmatprep.mubr.f32.mxu0 0.0
    %v408 = vand.u32 %v52, 4294901760
    %v409 = vsub.f32 %v52, %v408
    %410 = vmatmul.mubr.f32.gmra.mrb[0].mxu0 %v409
    %v411 = vpop.f32.mrb[0].mxu0
    %v412 = vadd.f32 %v308, %v411
    %v413 = vpop.f32.mrb[0].mxu0
    %414 = vdwg.mxu0
    %415 = vmatprep.subr.mxu0 0.0
    %v416 = vand.u32 %v53, 4294901760
    %417 = vmatpush1.msra.mxu0 %v416
    %418 = vmatprep.subr.mxu0 0.0
    %v419 = vand.u32 %v54, 4294901760
    %420 = vmatpush1.msra.mxu0 %v419
    %421 = vmatprep.subr.mxu0 0.0
    %v422 = vand.u32 %v55, 4294901760
    %423 = vmatpush1.msra.mxu0 %v422
    %424 = vmatprep.subr.mxu0 0.0
    %v425 = vand.u32 %v56, 4294901760
    %426 = vmatpush1.msra.mxu0 %v425
    %427 = vmatprep.subr.mxu0 0.0
    %v428 = vand.u32 %v57, 4294901760
    %429 = vmatpush1.msra.mxu0 %v428
    %430 = vmatprep.subr.mxu0 0.0
    %v431 = vand.u32 %v58, 4294901760
    %432 = vmatpush1.msra.mxu0 %v431
    %433 = vmatprep.subr.mxu0 0.0
    %v434 = vand.u32 %v59, 4294901760
    %435 = vmatpush1.msra.mxu0 %v434
    %436 = vmatprep.subr.mxu0 0.0
    %v437 = vand.u32 %v60, 4294901760
    %438 = vmatpush1.msra.mxu0 %v437
    %439 = vmatprep.subr.mxu0 0.0
    %v440 = vand.u32 %v61, 4294901760
    %441 = vmatpush1.msra.mxu0 %v440
    %442 = vmatprep.subr.mxu0 0.0
    %v443 = vand.u32 %v62, 4294901760
    %444 = vmatpush1.msra.mxu0 %v443
    %445 = vmatprep.subr.mxu0 0.0
    %v446 = vand.u32 %v63, 4294901760
    %447 = vmatpush1.msra.mxu0 %v446
    %448 = vmatprep.subr.mxu0 0.0
    %v449 = vand.u32 %v64, 4294901760
    %450 = vmatpush1.msra.mxu0 %v449
    %451 = vmatprep.subr.mxu0 0.0
    %v452 = vand.u32 %v65, 4294901760
    %453 = vmatpush1.msra.mxu0 %v452
    %454 = vmatprep.subr.mxu0 0.0
    %v455 = vand.u32 %v66, 4294901760
    %456 = vmatpush1.msra.mxu0 %v455
    %457 = vmatprep.subr.mxu0 0.0
    %v458 = vand.u32 %v67, 4294901760
    %459 = vmatpush1.msra.mxu0 %v458
    %460 = vmatprep.subr.mxu0 0.0
    %v461 = vand.u32 %v68, 4294901760
    %462 = vmatpush1.msra.mxu0 %v461
    %463 = vmatprep.subr.mxu0 0.0
    %464 = vmatpush1.msra.mxu0 0.0
    %465 = vmatprep.subr.mxu0 0.0
    %466 = vmatpush1.msra.mxu0 0.0
    %467 = vmatprep.subr.mxu0 0.0
    %468 = vmatpush1.msra.mxu0 0.0
    %469 = vmatprep.subr.mxu0 0.0
    %470 = vmatpush1.msra.mxu0 0.0
    %471 = vmatprep.subr.mxu0 0.0
    %472 = vmatpush1.msra.mxu0 0.0
    %473 = vmatprep.subr.mxu0 0.0
    %474 = vmatpush1.msra.mxu0 0.0
    %475 = vmatprep.subr.mxu0 0.0
    %476 = vmatpush1.msra.mxu0 0.0
    %477 = vmatprep.subr.mxu0 0.0
    %478 = vmatpush1.msra.mxu0 0.0
    %479 = vmatprep.subr.mxu0 0.0
    %480 = vmatpush1.msra.mxu0 0.0
    %481 = vmatprep.subr.mxu0 0.0
    %482 = vmatpush1.msra.mxu0 0.0
    %483 = vmatprep.subr.mxu0 0.0
    %484 = vmatpush1.msra.mxu0 0.0
    %485 = vmatprep.subr.mxu0 0.0
    %486 = vmatpush1.msra.mxu0 0.0
    %487 = vmatprep.subr.mxu0 0.0
    %488 = vmatpush1.msra.mxu0 0.0
    %489 = vmatprep.subr.mxu0 0.0
    %490 = vmatpush1.msra.mxu0 0.0
    %491 = vmatprep.subr.mxu0 0.0
    %492 = vmatpush1.msra.mxu0 0.0
    %493 = vmatprep.subr.mxu0 0.0
    %494 = vmatpush1.msra.mxu0 0.0
    %495 = vmatprep.mubr.f32.mxu0 0.0
    %v496 = vand.u32 %v52, 4294901760
    %v497 = vsub.f32 %v52, %v496
    %v498 = vand.u32 %v497, 4294901760
    %499 = vmatmul.mubr.f32.gmra.mrb[0].mxu0 %v498
    %v500 = vpop.f32.mrb[0].mxu0
    %v501 = vadd.f32 %v412, %v500
    %v502 = vpop.f32.mrb[0].mxu0
    %503 = vdwg.mxu0
    %504 = vmatprep.subr.mxu0 0.0
    %v505 = vand.u32 %v53, 4294901760
    %v506 = vsub.f32 %v53, %v505
    %v507 = vand.u32 %v506, 4294901760
    %508 = vmatpush1.msra.mxu0 %v507
    %509 = vmatprep.subr.mxu0 0.0
    %v510 = vand.u32 %v54, 4294901760
    %v511 = vsub.f32 %v54, %v510
    %v512 = vand.u32 %v511, 4294901760
    %513 = vmatpush1.msra.mxu0 %v512
    %514 = vmatprep.subr.mxu0 0.0
    %v515 = vand.u32 %v55, 4294901760
    %v516 = vsub.f32 %v55, %v515
    %v517 = vand.u32 %v516, 4294901760
    %518 = vmatpush1.msra.mxu0 %v517
    %519 = vmatprep.subr.mxu0 0.0
    %v520 = vand.u32 %v56, 4294901760
    %v521 = vsub.f32 %v56, %v520
    %v522 = vand.u32 %v521, 4294901760
    %523 = vmatpush1.msra.mxu0 %v522
    %524 = vmatprep.subr.mxu0 0.0
    %v525 = vand.u32 %v57, 4294901760
    %v526 = vsub.f32 %v57, %v525
    %v527 = vand.u32 %v526, 4294901760
    %528 = vmatpush1.msra.mxu0 %v527
    %529 = vmatprep.subr.mxu0 0.0
    %v530 = vand.u32 %v58, 4294901760
    %v531 = vsub.f32 %v58, %v530
    %v532 = vand.u32 %v531, 4294901760
    %533 = vmatpush1.msra.mxu0 %v532
    %534 = vmatprep.subr.mxu0 0.0
    %v535 = vand.u32 %v59, 4294901760
    %v536 = vsub.f32 %v59, %v535
    %v537 = vand.u32 %v536, 4294901760
    %538 = vmatpush1.msra.mxu0 %v537
    %539 = vmatprep.subr.mxu0 0.0
    %v540 = vand.u32 %v60, 4294901760
    %v541 = vsub.f32 %v60, %v540
    %v542 = vand.u32 %v541, 4294901760
    %543 = vmatpush1.msra.mxu0 %v542
    %544 = vmatprep.subr.mxu0 0.0
    %v545 = vand.u32 %v61, 4294901760
    %v546 = vsub.f32 %v61, %v545
    %v547 = vand.u32 %v546, 4294901760
    %548 = vmatpush1.msra.mxu0 %v547
    %549 = vmatprep.subr.mxu0 0.0
    %v550 = vand.u32 %v62, 4294901760
    %v551 = vsub.f32 %v62, %v550
    %v552 = vand.u32 %v551, 4294901760
    %553 = vmatpush1.msra.mxu0 %v552
    %554 = vmatprep.subr.mxu0 0.0
    %v555 = vand.u32 %v63, 4294901760
    %v556 = vsub.f32 %v63, %v555
    %v557 = vand.u32 %v556, 4294901760
    %558 = vmatpush1.msra.mxu0 %v557
    %559 = vmatprep.subr.mxu0 0.0
    %v560 = vand.u32 %v64, 4294901760
    %v561 = vsub.f32 %v64, %v560
    %v562 = vand.u32 %v561, 4294901760
    %563 = vmatpush1.msra.mxu0 %v562
    %564 = vmatprep.subr.mxu0 0.0
    %v565 = vand.u32 %v65, 4294901760
    %v566 = vsub.f32 %v65, %v565
    %v567 = vand.u32 %v566, 4294901760
    %568 = vmatpush1.msra.mxu0 %v567
    %569 = vmatprep.subr.mxu0 0.0
    %v570 = vand.u32 %v66, 4294901760
    %v571 = vsub.f32 %v66, %v570
    %v572 = vand.u32 %v571, 4294901760
    %573 = vmatpush1.msra.mxu0 %v572
    %574 = vmatprep.subr.mxu0 0.0
    %v575 = vand.u32 %v67, 4294901760
    %v576 = vsub.f32 %v67, %v575
    %v577 = vand.u32 %v576, 4294901760
    %578 = vmatpush1.msra.mxu0 %v577
    %579 = vmatprep.subr.mxu0 0.0
    %v580 = vand.u32 %v68, 4294901760
    %v581 = vsub.f32 %v68, %v580
    %v582 = vand.u32 %v581, 4294901760
    %583 = vmatpush1.msra.mxu0 %v582
    %584 = vmatprep.subr.mxu0 0.0
    %585 = vmatpush1.msra.mxu0 0.0
    %586 = vmatprep.subr.mxu0 0.0
    %587 = vmatpush1.msra.mxu0 0.0
    %588 = vmatprep.subr.mxu0 0.0
    %589 = vmatpush1.msra.mxu0 0.0
    %590 = vmatprep.subr.mxu0 0.0
    %591 = vmatpush1.msra.mxu0 0.0
    %592 = vmatprep.subr.mxu0 0.0
    %593 = vmatpush1.msra.mxu0 0.0
    %594 = vmatprep.subr.mxu0 0.0
    %595 = vmatpush1.msra.mxu0 0.0
    %596 = vmatprep.subr.mxu0 0.0
    %597 = vmatpush1.msra.mxu0 0.0
    %598 = vmatprep.subr.mxu0 0.0
    %599 = vmatpush1.msra.mxu0 0.0
    %600 = vmatprep.subr.mxu0 0.0
    %601 = vmatpush1.msra.mxu0 0.0
    %602 = vmatprep.subr.mxu0 0.0
    %603 = vmatpush1.msra.mxu0 0.0
    %604 = vmatprep.subr.mxu0 0.0
    %605 = vmatpush1.msra.mxu0 0.0
    %606 = vmatprep.subr.mxu0 0.0
    %607 = vmatpush1.msra.mxu0 0.0
    %608 = vmatprep.subr.mxu0 0.0
    %609 = vmatpush1.msra.mxu0 0.0
    %610 = vmatprep.subr.mxu0 0.0
    %611 = vmatpush1.msra.mxu0 0.0
    %612 = vmatprep.subr.mxu0 0.0
    %613 = vmatpush1.msra.mxu0 0.0
    %614 = vmatprep.subr.mxu0 0.0
    %615 = vmatpush1.msra.mxu0 0.0
    %616 = vmatprep.mubr.f32.mxu0 0.0
    %v617 = vand.u32 %v52, 4294901760
    %618 = vmatmul.mubr.f32.gmra.mrb[0].mxu0 %v617
    %v619 = vpop.f32.mrb[0].mxu0
    %v620 = vadd.f32 %v501, %v619
    %v621 = vpop.f32.mrb[0].mxu0
    %622 = vdwg.mxu0
    %623 = vmatprep.subr.mxu0 0.0
    %v624 = vand.u32 %v53, 4294901760
    %625 = vmatpush1.msra.mxu0 %v624
    %626 = vmatprep.subr.mxu0 0.0
    %v627 = vand.u32 %v54, 4294901760
    %628 = vmatpush1.msra.mxu0 %v627
    %629 = vmatprep.subr.mxu0 0.0
    %v630 = vand.u32 %v55, 4294901760
    %631 = vmatpush1.msra.mxu0 %v630
    %632 = vmatprep.subr.mxu0 0.0
    %v633 = vand.u32 %v56, 4294901760
    %634 = vmatpush1.msra.mxu0 %v633
    %635 = vmatprep.subr.mxu0 0.0
    %v636 = vand.u32 %v57, 4294901760
    %637 = vmatpush1.msra.mxu0 %v636
    %638 = vmatprep.subr.mxu0 0.0
    %v639 = vand.u32 %v58, 4294901760
    %640 = vmatpush1.msra.mxu0 %v639
    %641 = vmatprep.subr.mxu0 0.0
    %v642 = vand.u32 %v59, 4294901760
    %643 = vmatpush1.msra.mxu0 %v642
    %644 = vmatprep.subr.mxu0 0.0
    %v645 = vand.u32 %v60, 4294901760
    %646 = vmatpush1.msra.mxu0 %v645
    %647 = vmatprep.subr.mxu0 0.0
    %v648 = vand.u32 %v61, 4294901760
    %649 = vmatpush1.msra.mxu0 %v648
    %650 = vmatprep.subr.mxu0 0.0
    %v651 = vand.u32 %v62, 4294901760
    %652 = vmatpush1.msra.mxu0 %v651
    %653 = vmatprep.subr.mxu0 0.0
    %v654 = vand.u32 %v63, 4294901760
    %655 = vmatpush1.msra.mxu0 %v654
    %656 = vmatprep.subr.mxu0 0.0
    %v657 = vand.u32 %v64, 4294901760
    %658 = vmatpush1.msra.mxu0 %v657
    %659 = vmatprep.subr.mxu0 0.0
    %v660 = vand.u32 %v65, 4294901760
    %661 = vmatpush1.msra.mxu0 %v660
    %662 = vmatprep.subr.mxu0 0.0
    %v663 = vand.u32 %v66, 4294901760
    %664 = vmatpush1.msra.mxu0 %v663
    %665 = vmatprep.subr.mxu0 0.0
    %v666 = vand.u32 %v67, 4294901760
    %667 = vmatpush1.msra.mxu0 %v666
    %668 = vmatprep.subr.mxu0 0.0
    %v669 = vand.u32 %v68, 4294901760
    %670 = vmatpush1.msra.mxu0 %v669
    %671 = vmatprep.subr.mxu0 0.0
    %672 = vmatpush1.msra.mxu0 0.0
    %673 = vmatprep.subr.mxu0 0.0
    %674 = vmatpush1.msra.mxu0 0.0
    %675 = vmatprep.subr.mxu0 0.0
    %676 = vmatpush1.msra.mxu0 0.0
    %677 = vmatprep.subr.mxu0 0.0
    %678 = vmatpush1.msra.mxu0 0.0
    %679 = vmatprep.subr.mxu0 0.0
    %680 = vmatpush1.msra.mxu0 0.0
    %681 = vmatprep.subr.mxu0 0.0
    %682 = vmatpush1.msra.mxu0 0.0
    %683 = vmatprep.subr.mxu0 0.0
    %684 = vmatpush1.msra.mxu0 0.0
    %685 = vmatprep.subr.mxu0 0.0
    %686 = vmatpush1.msra.mxu0 0.0
    %687 = vmatprep.subr.mxu0 0.0
    %688 = vmatpush1.msra.mxu0 0.0
    %689 = vmatprep.subr.mxu0 0.0
    %690 = vmatpush1.msra.mxu0 0.0
    %691 = vmatprep.subr.mxu0 0.0
    %692 = vmatpush1.msra.mxu0 0.0
    %693 = vmatprep.subr.mxu0 0.0
    %694 = vmatpush1.msra.mxu0 0.0
    %695 = vmatprep.subr.mxu0 0.0
    %696 = vmatpush1.msra.mxu0 0.0
    %697 = vmatprep.subr.mxu0 0.0
    %698 = vmatpush1.msra.mxu0 0.0
    %699 = vmatprep.subr.mxu0 0.0
    %700 = vmatpush1.msra.mxu0 0.0
    %701 = vmatprep.subr.mxu0 0.0
    %702 = vmatpush1.msra.mxu0 0.0
    %703 = vmatprep.mubr.f32.mxu0 0.0
    %v704 = vand.u32 %v52, 4294901760
    %705 = vmatmul.mubr.f32.gmra.mrb[0].mxu0 %v704
    %v706 = vpop.f32.mrb[0].mxu0
    %v707 = vadd.f32 %v620, %v706
    %v708 = vpop.f32.mrb[0].mxu0
    %709 = vdwg.mxu0
    %v710 = vmul.f32 %v707, 0.00088388345
    %v711 = vld [vmem:[%s3] sm:$0x1]
    %v713 = vlaneseq
    %v714 = vshrl.u32 %v713, 7
    %v715 = vsub.s32 0, %v714
    %v716 = vrot.slane %v711, %v715
    %v718 = vadd.f32 %v710, %v716
    %vm719 = vcmp.ge.f32.partialorder %v718, 0.0
    %v720 = vsel %vm719, 1.4142135, 0.28284273
    %v721 = vmul.f32 %v718, %v720
    %s722 = scalar_lea.vmem [#allocation5], 128
    %v723 = vld [vmem:[%s722] sm:$0xff]
    %v724 = vld [vmem:[%s722 + $0x8] sm:$0xff]
    %v725 = vld [vmem:[%s722 + $0x10] sm:$0xff]
    %v726 = vld [vmem:[%s722 + $0x18] sm:$0xff]
    %v727 = vld [vmem:[%s722 + $0x20] sm:$0xff]
    %v728 = vld [vmem:[%s722 + $0x28] sm:$0xff]
    %v729 = vld [vmem:[%s722 + $0x30] sm:$0xff]
    %v730 = vld [vmem:[%s722 + $0x38] sm:$0xff]
    %v731 = vld [vmem:[%s722 + $0x40] sm:$0xff]
    %v732 = vld [vmem:[%s722 + $0x48] sm:$0xff]
    %v733 = vld [vmem:[%s722 + $0x50] sm:$0xff]
    %v734 = vld [vmem:[%s722 + $0x58] sm:$0xff]
    %v735 = vld [vmem:[%s722 + $0x60] sm:$0xff]
    %v736 = vld [vmem:[%s722 + $0x68] sm:$0xff]
    %v737 = vld [vmem:[%s722 + $0x70] sm:$0xff]
    %v738 = vld [vmem:[%s722 + $0x78] sm:$0xff]
    %739 = vmatprep.subr.mxu0 0.0
    %v740 = vand.u32 %v723, 4294901760
    %741 = vmatpush1.msra.mxu0 %v740
    %742 = vmatprep.subr.mxu0 0.0
    %v743 = vand.u32 %v724, 4294901760
    %744 = vmatpush1.msra.mxu0 %v743
    %745 = vmatprep.subr.mxu0 0.0
    %v746 = vand.u32 %v725, 4294901760
    %747 = vmatpush1.msra.mxu0 %v746
    %748 = vmatprep.subr.mxu0 0.0
    %v749 = vand.u32 %v726, 4294901760
    %750 = vmatpush1.msra.mxu0 %v749
    %751 = vmatprep.subr.mxu0 0.0
    %v752 = vand.u32 %v727, 4294901760
    %753 = vmatpush1.msra.mxu0 %v752
    %754 = vmatprep.subr.mxu0 0.0
    %v755 = vand.u32 %v728, 4294901760
    %756 = vmatpush1.msra.mxu0 %v755
    %757 = vmatprep.subr.mxu0 0.0
    %v758 = vand.u32 %v729, 4294901760
    %759 = vmatpush1.msra.mxu0 %v758
    %760 = vmatprep.subr.mxu0 0.0
    %v761 = vand.u32 %v730, 4294901760
    %762 = vmatpush1.msra.mxu0 %v761
    %763 = vmatprep.subr.mxu0 0.0
    %v764 = vand.u32 %v731, 4294901760
    %765 = vmatpush1.msra.mxu0 %v764
    %766 = vmatprep.subr.mxu0 0.0
    %v767 = vand.u32 %v732, 4294901760
    %768 = vmatpush1.msra.mxu0 %v767
    %769 = vmatprep.subr.mxu0 0.0
    %v770 = vand.u32 %v733, 4294901760
    %771 = vmatpush1.msra.mxu0 %v770
    %772 = vmatprep.subr.mxu0 0.0
    %v773 = vand.u32 %v734, 4294901760
    %774 = vmatpush1.msra.mxu0 %v773
    %775 = vmatprep.subr.mxu0 0.0
    %v776 = vand.u32 %v735, 4294901760
    %777 = vmatpush1.msra.mxu0 %v776
    %778 = vmatprep.subr.mxu0 0.0
    %v779 = vand.u32 %v736, 4294901760
    %780 = vmatpush1.msra.mxu0 %v779
    %781 = vmatprep.subr.mxu0 0.0
    %v782 = vand.u32 %v737, 4294901760
    %783 = vmatpush1.msra.mxu0 %v782
    %784 = vmatprep.subr.mxu0 0.0
    %v785 = vand.u32 %v738, 4294901760
    %786 = vmatpush1.msra.mxu0 %v785
    %787 = vmatprep.subr.mxu0 0.0
    %788 = vmatpush1.msra.mxu0 0.0
    %789 = vmatprep.subr.mxu0 0.0
    %790 = vmatpush1.msra.mxu0 0.0
    %791 = vmatprep.subr.mxu0 0.0
    %792 = vmatpush1.msra.mxu0 0.0
    %793 = vmatprep.subr.mxu0 0.0
    %794 = vmatpush1.msra.mxu0 0.0
    %795 = vmatprep.subr.mxu0 0.0
    %796 = vmatpush1.msra.mxu0 0.0
    %797 = vmatprep.subr.mxu0 0.0
    %798 = vmatpush1.msra.mxu0 0.0
    %799 = vmatprep.subr.mxu0 0.0
    %800 = vmatpush1.msra.mxu0 0.0
    %801 = vmatprep.subr.mxu0 0.0
    %802 = vmatpush1.msra.mxu0 0.0
    %803 = vmatprep.subr.mxu0 0.0
    %804 = vmatpush1.msra.mxu0 0.0
    %805 = vmatprep.subr.mxu0 0.0
    %806 = vmatpush1.msra.mxu0 0.0
    %807 = vmatprep.subr.mxu0 0.0
    %808 = vmatpush1.msra.mxu0 0.0
    %809 = vmatprep.subr.mxu0 0.0
    %810 = vmatpush1.msra.mxu0 0.0
    %811 = vmatprep.subr.mxu0 0.0
    %812 = vmatpush1.msra.mxu0 0.0
    %813 = vmatprep.subr.mxu0 0.0
    %814 = vmatpush1.msra.mxu0 0.0
    %815 = vmatprep.subr.mxu0 0.0
    %816 = vmatpush1.msra.mxu0 0.0
    %817 = vmatprep.subr.mxu0 0.0
    %818 = vmatpush1.msra.mxu0 0.0
    %819 = vmatprep.mubr.f32.mxu0 0.0
    %v820 = vand.u32 %v721, 4294901760
    %v821 = vsub.f32 %v721, %v820
    %v822 = vand.u32 %v821, 4294901760
    %v823 = vsub.f32 %v821, %v822
    %v824 = vand.u32 %v823, 4294901760
    %825 = vmatmul.mubr.f32.gmra.mrb[0].mxu0 %v824
    %v826 = vpop.f32.mrb[0].mxu0
    %v827 = vadd.f32 0.0, %v826
    %v828 = vpop.f32.mrb[0].mxu0
    %829 = vdwg.mxu0
    %830 = vmatprep.subr.mxu0 0.0
    %v831 = vand.u32 %v723, 4294901760
    %v832 = vsub.f32 %v723, %v831
    %v833 = vand.u32 %v832, 4294901760
    %v834 = vsub.f32 %v832, %v833
    %v835 = vand.u32 %v834, 4294901760
    %836 = vmatpush1.msra.mxu0 %v835
    %837 = vmatprep.subr.mxu0 0.0
    %v838 = vand.u32 %v724, 4294901760
    %v839 = vsub.f32 %v724, %v838
    %v840 = vand.u32 %v839, 4294901760
    %v841 = vsub.f32 %v839, %v840
    %v842 = vand.u32 %v841, 4294901760
    %843 = vmatpush1.msra.mxu0 %v842
    %844 = vmatprep.subr.mxu0 0.0
    %v845 = vand.u32 %v725, 4294901760
    %v846 = vsub.f32 %v725, %v845
    %v847 = vand.u32 %v846, 4294901760
    %v848 = vsub.f32 %v846, %v847
    %v849 = vand.u32 %v848, 4294901760
    %850 = vmatpush1.msra.mxu0 %v849
    %851 = vmatprep.subr.mxu0 0.0
    %v852 = vand.u32 %v726, 4294901760
    %v853 = vsub.f32 %v726, %v852
    %v854 = vand.u32 %v853, 4294901760
    %v855 = vsub.f32 %v853, %v854
    %v856 = vand.u32 %v855, 4294901760
    %857 = vmatpush1.msra.mxu0 %v856
    %858 = vmatprep.subr.mxu0 0.0
    %v859 = vand.u32 %v727, 4294901760
    %v860 = vsub.f32 %v727, %v859
    %v861 = vand.u32 %v860, 4294901760
    %v862 = vsub.f32 %v860, %v861
    %v863 = vand.u32 %v862, 4294901760
    %864 = vmatpush1.msra.mxu0 %v863
    %865 = vmatprep.subr.mxu0 0.0
    %v866 = vand.u32 %v728, 4294901760
    %v867 = vsub.f32 %v728, %v866
    %v868 = vand.u32 %v867, 4294901760
    %v869 = vsub.f32 %v867, %v868
    %v870 = vand.u32 %v869, 4294901760
    %871 = vmatpush1.msra.mxu0 %v870
    %872 = vmatprep.subr.mxu0 0.0
    %v873 = vand.u32 %v729, 4294901760
    %v874 = vsub.f32 %v729, %v873
    %v875 = vand.u32 %v874, 4294901760
    %v876 = vsub.f32 %v874, %v875
    %v877 = vand.u32 %v876, 4294901760
    %878 = vmatpush1.msra.mxu0 %v877
    %879 = vmatprep.subr.mxu0 0.0
    %v880 = vand.u32 %v730, 4294901760
    %v881 = vsub.f32 %v730, %v880
    %v882 = vand.u32 %v881, 4294901760
    %v883 = vsub.f32 %v881, %v882
    %v884 = vand.u32 %v883, 4294901760
    %885 = vmatpush1.msra.mxu0 %v884
    %886 = vmatprep.subr.mxu0 0.0
    %v887 = vand.u32 %v731, 4294901760
    %v888 = vsub.f32 %v731, %v887
    %v889 = vand.u32 %v888, 4294901760
    %v890 = vsub.f32 %v888, %v889
    %v891 = vand.u32 %v890, 4294901760
    %892 = vmatpush1.msra.mxu0 %v891
    %893 = vmatprep.subr.mxu0 0.0
    %v894 = vand.u32 %v732, 4294901760
    %v895 = vsub.f32 %v732, %v894
    %v896 = vand.u32 %v895, 4294901760
    %v897 = vsub.f32 %v895, %v896
    %v898 = vand.u32 %v897, 4294901760
    %899 = vmatpush1.msra.mxu0 %v898
    %900 = vmatprep.subr.mxu0 0.0
    %v901 = vand.u32 %v733, 4294901760
    %v902 = vsub.f32 %v733, %v901
    %v903 = vand.u32 %v902, 4294901760
    %v904 = vsub.f32 %v902, %v903
    %v905 = vand.u32 %v904, 4294901760
    %906 = vmatpush1.msra.mxu0 %v905
    %907 = vmatprep.subr.mxu0 0.0
    %v908 = vand.u32 %v734, 4294901760
    %v909 = vsub.f32 %v734, %v908
    %v910 = vand.u32 %v909, 4294901760
    %v911 = vsub.f32 %v909, %v910
    %v912 = vand.u32 %v911, 4294901760
    %913 = vmatpush1.msra.mxu0 %v912
    %914 = vmatprep.subr.mxu0 0.0
    %v915 = vand.u32 %v735, 4294901760
    %v916 = vsub.f32 %v735, %v915
    %v917 = vand.u32 %v916, 4294901760
    %v918 = vsub.f32 %v916, %v917
    %v919 = vand.u32 %v918, 4294901760
    %920 = vmatpush1.msra.mxu0 %v919
    %921 = vmatprep.subr.mxu0 0.0
    %v922 = vand.u32 %v736, 4294901760
    %v923 = vsub.f32 %v736, %v922
    %v924 = vand.u32 %v923, 4294901760
    %v925 = vsub.f32 %v923, %v924
    %v926 = vand.u32 %v925, 4294901760
    %927 = vmatpush1.msra.mxu0 %v926
    %928 = vmatprep.subr.mxu0 0.0
    %v929 = vand.u32 %v737, 4294901760
    %v930 = vsub.f32 %v737, %v929
    %v931 = vand.u32 %v930, 4294901760
    %v932 = vsub.f32 %v930, %v931
    %v933 = vand.u32 %v932, 4294901760
    %934 = vmatpush1.msra.mxu0 %v933
    %935 = vmatprep.subr.mxu0 0.0
    %v936 = vand.u32 %v738, 4294901760
    %v937 = vsub.f32 %v738, %v936
    %v938 = vand.u32 %v937, 4294901760
    %v939 = vsub.f32 %v937, %v938
    %v940 = vand.u32 %v939, 4294901760
    %941 = vmatpush1.msra.mxu0 %v940
    %942 = vmatprep.subr.mxu0 0.0
    %943 = vmatpush1.msra.mxu0 0.0
    %944 = vmatprep.subr.mxu0 0.0
    %945 = vmatpush1.msra.mxu0 0.0
    %946 = vmatprep.subr.mxu0 0.0
    %947 = vmatpush1.msra.mxu0 0.0
    %948 = vmatprep.subr.mxu0 0.0
    %949 = vmatpush1.msra.mxu0 0.0
    %950 = vmatprep.subr.mxu0 0.0
    %951 = vmatpush1.msra.mxu0 0.0
    %952 = vmatprep.subr.mxu0 0.0
    %953 = vmatpush1.msra.mxu0 0.0
    %954 = vmatprep.subr.mxu0 0.0
    %955 = vmatpush1.msra.mxu0 0.0
    %956 = vmatprep.subr.mxu0 0.0
    %957 = vmatpush1.msra.mxu0 0.0
    %958 = vmatprep.subr.mxu0 0.0
    %959 = vmatpush1.msra.mxu0 0.0
    %960 = vmatprep.subr.mxu0 0.0
    %961 = vmatpush1.msra.mxu0 0.0
    %962 = vmatprep.subr.mxu0 0.0
    %963 = vmatpush1.msra.mxu0 0.0
    %964 = vmatprep.subr.mxu0 0.0
    %965 = vmatpush1.msra.mxu0 0.0
    %966 = vmatprep.subr.mxu0 0.0
    %967 = vmatpush1.msra.mxu0 0.0
    %968 = vmatprep.subr.mxu0 0.0
    %969 = vmatpush1.msra.mxu0 0.0
    %970 = vmatprep.subr.mxu0 0.0
    %971 = vmatpush1.msra.mxu0 0.0
    %972 = vmatprep.subr.mxu0 0.0
    %973 = vmatpush1.msra.mxu0 0.0
    %974 = vmatprep.mubr.f32.mxu0 0.0
    %v975 = vand.u32 %v721, 4294901760
    %976 = vmatmul.mubr.f32.gmra.mrb[0].mxu0 %v975
    %v977 = vpop.f32.mrb[0].mxu0
    %v978 = vadd.f32 %v827, %v977
    %v979 = vpop.f32.mrb[0].mxu0
    %980 = vdwg.mxu0
    %981 = vmatprep.subr.mxu0 0.0
    %v982 = vand.u32 %v723, 4294901760
    %v983 = vsub.f32 %v723, %v982
    %984 = vmatpush1.msra.mxu0 %v983
    %985 = vmatprep.subr.mxu0 0.0
    %v986 = vand.u32 %v724, 4294901760
    %v987 = vsub.f32 %v724, %v986
    %988 = vmatpush1.msra.mxu0 %v987
    %989 = vmatprep.subr.mxu0 0.0
    %v990 = vand.u32 %v725, 4294901760
    %v991 = vsub.f32 %v725, %v990
    %992 = vmatpush1.msra.mxu0 %v991
    %993 = vmatprep.subr.mxu0 0.0
    %v994 = vand.u32 %v726, 4294901760
    %v995 = vsub.f32 %v726, %v994
    %996 = vmatpush1.msra.mxu0 %v995
    %997 = vmatprep.subr.mxu0 0.0
    %v998 = vand.u32 %v727, 4294901760
    %v999 = vsub.f32 %v727, %v998
    %1000 = vmatpush1.msra.mxu0 %v999
    %1001 = vmatprep.subr.mxu0 0.0
    %v1002 = vand.u32 %v728, 4294901760
    %v1003 = vsub.f32 %v728, %v1002
    %1004 = vmatpush1.msra.mxu0 %v1003
    %1005 = vmatprep.subr.mxu0 0.0
    %v1006 = vand.u32 %v729, 4294901760
    %v1007 = vsub.f32 %v729, %v1006
    %1008 = vmatpush1.msra.mxu0 %v1007
    %1009 = vmatprep.subr.mxu0 0.0
    %v1010 = vand.u32 %v730, 4294901760
    %v1011 = vsub.f32 %v730, %v1010
    %1012 = vmatpush1.msra.mxu0 %v1011
    %1013 = vmatprep.subr.mxu0 0.0
    %v1014 = vand.u32 %v731, 4294901760
    %v1015 = vsub.f32 %v731, %v1014
    %1016 = vmatpush1.msra.mxu0 %v1015
    %1017 = vmatprep.subr.mxu0 0.0
    %v1018 = vand.u32 %v732, 4294901760
    %v1019 = vsub.f32 %v732, %v1018
    %1020 = vmatpush1.msra.mxu0 %v1019
    %1021 = vmatprep.subr.mxu0 0.0
    %v1022 = vand.u32 %v733, 4294901760
    %v1023 = vsub.f32 %v733, %v1022
    %1024 = vmatpush1.msra.mxu0 %v1023
    %1025 = vmatprep.subr.mxu0 0.0
    %v1026 = vand.u32 %v734, 4294901760
    %v1027 = vsub.f32 %v734, %v1026
    %1028 = vmatpush1.msra.mxu0 %v1027
    %1029 = vmatprep.subr.mxu0 0.0
    %v1030 = vand.u32 %v735, 4294901760
    %v1031 = vsub.f32 %v735, %v1030
    %1032 = vmatpush1.msra.mxu0 %v1031
    %1033 = vmatprep.subr.mxu0 0.0
    %v1034 = vand.u32 %v736, 4294901760
    %v1035 = vsub.f32 %v736, %v1034
    %1036 = vmatpush1.msra.mxu0 %v1035
    %1037 = vmatprep.subr.mxu0 0.0
    %v1038 = vand.u32 %v737, 4294901760
    %v1039 = vsub.f32 %v737, %v1038
    %1040 = vmatpush1.msra.mxu0 %v1039
    %1041 = vmatprep.subr.mxu0 0.0
    %v1042 = vand.u32 %v738, 4294901760
    %v1043 = vsub.f32 %v738, %v1042
    %1044 = vmatpush1.msra.mxu0 %v1043
    %1045 = vmatprep.subr.mxu0 0.0
    %1046 = vmatpush1.msra.mxu0 0.0
    %1047 = vmatprep.subr.mxu0 0.0
    %1048 = vmatpush1.msra.mxu0 0.0
    %1049 = vmatprep.subr.mxu0 0.0
    %1050 = vmatpush1.msra.mxu0 0.0
    %1051 = vmatprep.subr.mxu0 0.0
    %1052 = vmatpush1.msra.mxu0 0.0
    %1053 = vmatprep.subr.mxu0 0.0
    %1054 = vmatpush1.msra.mxu0 0.0
    %1055 = vmatprep.subr.mxu0 0.0
    %1056 = vmatpush1.msra.mxu0 0.0
    %1057 = vmatprep.subr.mxu0 0.0
    %1058 = vmatpush1.msra.mxu0 0.0
    %1059 = vmatprep.subr.mxu0 0.0
    %1060 = vmatpush1.msra.mxu0 0.0
    %1061 = vmatprep.subr.mxu0 0.0
    %1062 = vmatpush1.msra.mxu0 0.0
    %1063 = vmatprep.subr.mxu0 0.0
    %1064 = vmatpush1.msra.mxu0 0.0
    %1065 = vmatprep.subr.mxu0 0.0
    %1066 = vmatpush1.msra.mxu0 0.0
    %1067 = vmatprep.subr.mxu0 0.0
    %1068 = vmatpush1.msra.mxu0 0.0
    %1069 = vmatprep.subr.mxu0 0.0
    %1070 = vmatpush1.msra.mxu0 0.0
    %1071 = vmatprep.subr.mxu0 0.0
    %1072 = vmatpush1.msra.mxu0 0.0
    %1073 = vmatprep.subr.mxu0 0.0
    %1074 = vmatpush1.msra.mxu0 0.0
    %1075 = vmatprep.subr.mxu0 0.0
    %1076 = vmatpush1.msra.mxu0 0.0
    %1077 = vmatprep.mubr.f32.mxu0 0.0
    %v1078 = vand.u32 %v721, 4294901760
    %v1079 = vsub.f32 %v721, %v1078
    %1080 = vmatmul.mubr.f32.gmra.mrb[0].mxu0 %v1079
    %v1081 = vpop.f32.mrb[0].mxu0
    %v1082 = vadd.f32 %v978, %v1081
    %v1083 = vpop.f32.mrb[0].mxu0
    %1084 = vdwg.mxu0
    %1085 = vmatprep.subr.mxu0 0.0
    %v1086 = vand.u32 %v723, 4294901760
    %1087 = vmatpush1.msra.mxu0 %v1086
    %1088 = vmatprep.subr.mxu0 0.0
    %v1089 = vand.u32 %v724, 4294901760
    %1090 = vmatpush1.msra.mxu0 %v1089
    %1091 = vmatprep.subr.mxu0 0.0
    %v1092 = vand.u32 %v725, 4294901760
    %1093 = vmatpush1.msra.mxu0 %v1092
    %1094 = vmatprep.subr.mxu0 0.0
    %v1095 = vand.u32 %v726, 4294901760
    %1096 = vmatpush1.msra.mxu0 %v1095
    %1097 = vmatprep.subr.mxu0 0.0
    %v1098 = vand.u32 %v727, 4294901760
    %1099 = vmatpush1.msra.mxu0 %v1098
    %1100 = vmatprep.subr.mxu0 0.0
    %v1101 = vand.u32 %v728, 4294901760
    %1102 = vmatpush1.msra.mxu0 %v1101
    %1103 = vmatprep.subr.mxu0 0.0
    %v1104 = vand.u32 %v729, 4294901760
    %1105 = vmatpush1.msra.mxu0 %v1104
    %1106 = vmatprep.subr.mxu0 0.0
    %v1107 = vand.u32 %v730, 4294901760
    %1108 = vmatpush1.msra.mxu0 %v1107
    %1109 = vmatprep.subr.mxu0 0.0
    %v1110 = vand.u32 %v731, 4294901760
    %1111 = vmatpush1.msra.mxu0 %v1110
    %1112 = vmatprep.subr.mxu0 0.0
    %v1113 = vand.u32 %v732, 4294901760
    %1114 = vmatpush1.msra.mxu0 %v1113
    %1115 = vmatprep.subr.mxu0 0.0
    %v1116 = vand.u32 %v733, 4294901760
    %1117 = vmatpush1.msra.mxu0 %v1116
    %1118 = vmatprep.subr.mxu0 0.0
    %v1119 = vand.u32 %v734, 4294901760
    %1120 = vmatpush1.msra.mxu0 %v1119
    %1121 = vmatprep.subr.mxu0 0.0
    %v1122 = vand.u32 %v735, 4294901760
    %1123 = vmatpush1.msra.mxu0 %v1122
    %1124 = vmatprep.subr.mxu0 0.0
    %v1125 = vand.u32 %v736, 4294901760
    %1126 = vmatpush1.msra.mxu0 %v1125
    %1127 = vmatprep.subr.mxu0 0.0
    %v1128 = vand.u32 %v737, 4294901760
    %1129 = vmatpush1.msra.mxu0 %v1128
    %1130 = vmatprep.subr.mxu0 0.0
    %v1131 = vand.u32 %v738, 4294901760
    %1132 = vmatpush1.msra.mxu0 %v1131
    %1133 = vmatprep.subr.mxu0 0.0
    %1134 = vmatpush1.msra.mxu0 0.0
    %1135 = vmatprep.subr.mxu0 0.0
    %1136 = vmatpush1.msra.mxu0 0.0
    %1137 = vmatprep.subr.mxu0 0.0
    %1138 = vmatpush1.msra.mxu0 0.0
    %1139 = vmatprep.subr.mxu0 0.0
    %1140 = vmatpush1.msra.mxu0 0.0
    %1141 = vmatprep.subr.mxu0 0.0
    %1142 = vmatpush1.msra.mxu0 0.0
    %1143 = vmatprep.subr.mxu0 0.0
    %1144 = vmatpush1.msra.mxu0 0.0
    %1145 = vmatprep.subr.mxu0 0.0
    %1146 = vmatpush1.msra.mxu0 0.0
    %1147 = vmatprep.subr.mxu0 0.0
    %1148 = vmatpush1.msra.mxu0 0.0
    %1149 = vmatprep.subr.mxu0 0.0
    %1150 = vmatpush1.msra.mxu0 0.0
    %1151 = vmatprep.subr.mxu0 0.0
    %1152 = vmatpush1.msra.mxu0 0.0
    %1153 = vmatprep.subr.mxu0 0.0
    %1154 = vmatpush1.msra.mxu0 0.0
    %1155 = vmatprep.subr.mxu0 0.0
    %1156 = vmatpush1.msra.mxu0 0.0
    %1157 = vmatprep.subr.mxu0 0.0
    %1158 = vmatpush1.msra.mxu0 0.0
    %1159 = vmatprep.subr.mxu0 0.0
    %1160 = vmatpush1.msra.mxu0 0.0
    %1161 = vmatprep.subr.mxu0 0.0
    %1162 = vmatpush1.msra.mxu0 0.0
    %1163 = vmatprep.subr.mxu0 0.0
    %1164 = vmatpush1.msra.mxu0 0.0
    %1165 = vmatprep.mubr.f32.mxu0 0.0
    %v1166 = vand.u32 %v721, 4294901760
    %v1167 = vsub.f32 %v721, %v1166
    %v1168 = vand.u32 %v1167, 4294901760
    %1169 = vmatmul.mubr.f32.gmra.mrb[0].mxu0 %v1168
    %v1170 = vpop.f32.mrb[0].mxu0
    %v1171 = vadd.f32 %v1082, %v1170
    %v1172 = vpop.f32.mrb[0].mxu0
    %1173 = vdwg.mxu0
    %1174 = vmatprep.subr.mxu0 0.0
    %v1175 = vand.u32 %v723, 4294901760
    %v1176 = vsub.f32 %v723, %v1175
    %v1177 = vand.u32 %v1176, 4294901760
    %1178 = vmatpush1.msra.mxu0 %v1177
    %1179 = vmatprep.subr.mxu0 0.0
    %v1180 = vand.u32 %v724, 4294901760
    %v1181 = vsub.f32 %v724, %v1180
    %v1182 = vand.u32 %v1181, 4294901760
    %1183 = vmatpush1.msra.mxu0 %v1182
    %1184 = vmatprep.subr.mxu0 0.0
    %v1185 = vand.u32 %v725, 4294901760
    %v1186 = vsub.f32 %v725, %v1185
    %v1187 = vand.u32 %v1186, 4294901760
    %1188 = vmatpush1.msra.mxu0 %v1187
    %1189 = vmatprep.subr.mxu0 0.0
    %v1190 = vand.u32 %v726, 4294901760
    %v1191 = vsub.f32 %v726, %v1190
    %v1192 = vand.u32 %v1191, 4294901760
    %1193 = vmatpush1.msra.mxu0 %v1192
    %1194 = vmatprep.subr.mxu0 0.0
    %v1195 = vand.u32 %v727, 4294901760
    %v1196 = vsub.f32 %v727, %v1195
    %v1197 = vand.u32 %v1196, 4294901760
    %1198 = vmatpush1.msra.mxu0 %v1197
    %1199 = vmatprep.subr.mxu0 0.0
    %v1200 = vand.u32 %v728, 4294901760
    %v1201 = vsub.f32 %v728, %v1200
    %v1202 = vand.u32 %v1201, 4294901760
    %1203 = vmatpush1.msra.mxu0 %v1202
    %1204 = vmatprep.subr.mxu0 0.0
    %v1205 = vand.u32 %v729, 4294901760
    %v1206 = vsub.f32 %v729, %v1205
    %v1207 = vand.u32 %v1206, 4294901760
    %1208 = vmatpush1.msra.mxu0 %v1207
    %1209 = vmatprep.subr.mxu0 0.0
    %v1210 = vand.u32 %v730, 4294901760
    %v1211 = vsub.f32 %v730, %v1210
    %v1212 = vand.u32 %v1211, 4294901760
    %1213 = vmatpush1.msra.mxu0 %v1212
    %1214 = vmatprep.subr.mxu0 0.0
    %v1215 = vand.u32 %v731, 4294901760
    %v1216 = vsub.f32 %v731, %v1215
    %v1217 = vand.u32 %v1216, 4294901760
    %1218 = vmatpush1.msra.mxu0 %v1217
    %1219 = vmatprep.subr.mxu0 0.0
    %v1220 = vand.u32 %v732, 4294901760
    %v1221 = vsub.f32 %v732, %v1220
    %v1222 = vand.u32 %v1221, 4294901760
    %1223 = vmatpush1.msra.mxu0 %v1222
    %1224 = vmatprep.subr.mxu0 0.0
    %v1225 = vand.u32 %v733, 4294901760
    %v1226 = vsub.f32 %v733, %v1225
    %v1227 = vand.u32 %v1226, 4294901760
    %1228 = vmatpush1.msra.mxu0 %v1227
    %1229 = vmatprep.subr.mxu0 0.0
    %v1230 = vand.u32 %v734, 4294901760
    %v1231 = vsub.f32 %v734, %v1230
    %v1232 = vand.u32 %v1231, 4294901760
    %1233 = vmatpush1.msra.mxu0 %v1232
    %1234 = vmatprep.subr.mxu0 0.0
    %v1235 = vand.u32 %v735, 4294901760
    %v1236 = vsub.f32 %v735, %v1235
    %v1237 = vand.u32 %v1236, 4294901760
    %1238 = vmatpush1.msra.mxu0 %v1237
    %1239 = vmatprep.subr.mxu0 0.0
    %v1240 = vand.u32 %v736, 4294901760
    %v1241 = vsub.f32 %v736, %v1240
    %v1242 = vand.u32 %v1241, 4294901760
    %1243 = vmatpush1.msra.mxu0 %v1242
    %1244 = vmatprep.subr.mxu0 0.0
    %v1245 = vand.u32 %v737, 4294901760
    %v1246 = vsub.f32 %v737, %v1245
    %v1247 = vand.u32 %v1246, 4294901760
    %1248 = vmatpush1.msra.mxu0 %v1247
    %1249 = vmatprep.subr.mxu0 0.0
    %v1250 = vand.u32 %v738, 4294901760
    %v1251 = vsub.f32 %v738, %v1250
    %v1252 = vand.u32 %v1251, 4294901760
    %1253 = vmatpush1.msra.mxu0 %v1252
    %1254 = vmatprep.subr.mxu0 0.0
    %1255 = vmatpush1.msra.mxu0 0.0
    %1256 = vmatprep.subr.mxu0 0.0
    %1257 = vmatpush1.msra.mxu0 0.0
    %1258 = vmatprep.subr.mxu0 0.0
    %1259 = vmatpush1.msra.mxu0 0.0
    %1260 = vmatprep.subr.mxu0 0.0
    %1261 = vmatpush1.msra.mxu0 0.0
    %1262 = vmatprep.subr.mxu0 0.0
    %1263 = vmatpush1.msra.mxu0 0.0
    %1264 = vmatprep.subr.mxu0 0.0
    %1265 = vmatpush1.msra.mxu0 0.0
    %1266 = vmatprep.subr.mxu0 0.0
    %1267 = vmatpush1.msra.mxu0 0.0
    %1268 = vmatprep.subr.mxu0 0.0
    %1269 = vmatpush1.msra.mxu0 0.0
    %1270 = vmatprep.subr.mxu0 0.0
    %1271 = vmatpush1.msra.mxu0 0.0
    %1272 = vmatprep.subr.mxu0 0.0
    %1273 = vmatpush1.msra.mxu0 0.0
    %1274 = vmatprep.subr.mxu0 0.0
    %1275 = vmatpush1.msra.mxu0 0.0
    %1276 = vmatprep.subr.mxu0 0.0
    %1277 = vmatpush1.msra.mxu0 0.0
    %1278 = vmatprep.subr.mxu0 0.0
    %1279 = vmatpush1.msra.mxu0 0.0
    %1280 = vmatprep.subr.mxu0 0.0
    %1281 = vmatpush1.msra.mxu0 0.0
    %1282 = vmatprep.subr.mxu0 0.0
    %1283 = vmatpush1.msra.mxu0 0.0
    %1284 = vmatprep.subr.mxu0 0.0
    %1285 = vmatpush1.msra.mxu0 0.0
    %1286 = vmatprep.mubr.f32.mxu0 0.0
    %v1287 = vand.u32 %v721, 4294901760
    %1288 = vmatmul.mubr.f32.gmra.mrb[0].mxu0 %v1287
    %v1289 = vpop.f32.mrb[0].mxu0
    %v1290 = vadd.f32 %v1171, %v1289
    %v1291 = vpop.f32.mrb[0].mxu0
    %1292 = vdwg.mxu0
    %1293 = vmatprep.subr.mxu0 0.0
    %v1294 = vand.u32 %v723, 4294901760
    %1295 = vmatpush1.msra.mxu0 %v1294
    %1296 = vmatprep.subr.mxu0 0.0
    %v1297 = vand.u32 %v724, 4294901760
    %1298 = vmatpush1.msra.mxu0 %v1297
    %1299 = vmatprep.subr.mxu0 0.0
    %v1300 = vand.u32 %v725, 4294901760
    %1301 = vmatpush1.msra.mxu0 %v1300
    %1302 = vmatprep.subr.mxu0 0.0
    %v1303 = vand.u32 %v726, 4294901760
    %1304 = vmatpush1.msra.mxu0 %v1303
    %1305 = vmatprep.subr.mxu0 0.0
    %v1306 = vand.u32 %v727, 4294901760
    %1307 = vmatpush1.msra.mxu0 %v1306
    %1308 = vmatprep.subr.mxu0 0.0
    %v1309 = vand.u32 %v728, 4294901760
    %1310 = vmatpush1.msra.mxu0 %v1309
    %1311 = vmatprep.subr.mxu0 0.0
    %v1312 = vand.u32 %v729, 4294901760
    %1313 = vmatpush1.msra.mxu0 %v1312
    %1314 = vmatprep.subr.mxu0 0.0
    %v1315 = vand.u32 %v730, 4294901760
    %1316 = vmatpush1.msra.mxu0 %v1315
    %1317 = vmatprep.subr.mxu0 0.0
    %v1318 = vand.u32 %v731, 4294901760
    %1319 = vmatpush1.msra.mxu0 %v1318
    %1320 = vmatprep.subr.mxu0 0.0
    %v1321 = vand.u32 %v732, 4294901760
    %1322 = vmatpush1.msra.mxu0 %v1321
    %1323 = vmatprep.subr.mxu0 0.0
    %v1324 = vand.u32 %v733, 4294901760
    %1325 = vmatpush1.msra.mxu0 %v1324
    %1326 = vmatprep.subr.mxu0 0.0
    %v1327 = vand.u32 %v734, 4294901760
    %1328 = vmatpush1.msra.mxu0 %v1327
    %1329 = vmatprep.subr.mxu0 0.0
    %v1330 = vand.u32 %v735, 4294901760
    %1331 = vmatpush1.msra.mxu0 %v1330
    %1332 = vmatprep.subr.mxu0 0.0
    %v1333 = vand.u32 %v736, 4294901760
    %1334 = vmatpush1.msra.mxu0 %v1333
    %1335 = vmatprep.subr.mxu0 0.0
    %v1336 = vand.u32 %v737, 4294901760
    %1337 = vmatpush1.msra.mxu0 %v1336
    %1338 = vmatprep.subr.mxu0 0.0
    %v1339 = vand.u32 %v738, 4294901760
    %1340 = vmatpush1.msra.mxu0 %v1339
    %1341 = vmatprep.subr.mxu0 0.0
    %1342 = vmatpush1.msra.mxu0 0.0
    %1343 = vmatprep.subr.mxu0 0.0
    %1344 = vmatpush1.msra.mxu0 0.0
    %1345 = vmatprep.subr.mxu0 0.0
    %1346 = vmatpush1.msra.mxu0 0.0
    %1347 = vmatprep.subr.mxu0 0.0
    %1348 = vmatpush1.msra.mxu0 0.0
    %1349 = vmatprep.subr.mxu0 0.0
    %1350 = vmatpush1.msra.mxu0 0.0
    %1351 = vmatprep.subr.mxu0 0.0
    %1352 = vmatpush1.msra.mxu0 0.0
    %1353 = vmatprep.subr.mxu0 0.0
    %1354 = vmatpush1.msra.mxu0 0.0
    %1355 = vmatprep.subr.mxu0 0.0
    %1356 = vmatpush1.msra.mxu0 0.0
    %1357 = vmatprep.subr.mxu0 0.0
    %1358 = vmatpush1.msra.mxu0 0.0
    %1359 = vmatprep.subr.mxu0 0.0
    %1360 = vmatpush1.msra.mxu0 0.0
    %1361 = vmatprep.subr.mxu0 0.0
    %1362 = vmatpush1.msra.mxu0 0.0
    %1363 = vmatprep.subr.mxu0 0.0
    %1364 = vmatpush1.msra.mxu0 0.0
    %1365 = vmatprep.subr.mxu0 0.0
    %1366 = vmatpush1.msra.mxu0 0.0
    %1367 = vmatprep.subr.mxu0 0.0
    %1368 = vmatpush1.msra.mxu0 0.0
    %1369 = vmatprep.subr.mxu0 0.0
    %1370 = vmatpush1.msra.mxu0 0.0
    %1371 = vmatprep.subr.mxu0 0.0
    %1372 = vmatpush1.msra.mxu0 0.0
    %1373 = vmatprep.mubr.f32.mxu0 0.0
    %v1374 = vand.u32 %v721, 4294901760
    %1375 = vmatmul.mubr.f32.gmra.mrb[0].mxu0 %v1374
    %v1376 = vpop.f32.mrb[0].mxu0
    %v1377 = vadd.f32 %v1290, %v1376
    %v1378 = vpop.f32.mrb[0].mxu0
    %1379 = vdwg.mxu0
    %v1380 = vmul.f32 %v1377, 0.00088388345
    %s1381 = scalar_lea.vmem %s3, 1
    %v1382 = vld [vmem:[%s1381] sm:$0x1]
    %v1384 = vlaneseq
    %v1385 = vshrl.u32 %v1384, 7
    %v1386 = vsub.s32 0, %v1385
    %v1387 = vrot.slane %v1382, %v1386
    %v1389 = vadd.f32 %v1380, %v1387
    %vm1390 = vcmp.ge.f32.partialorder %v1389, 0.0
    %v1391 = vsel %vm1390, 1.4142135, 0.28284273
    %v1392 = vmul.f32 %v1389, %v1391
    %s1393 = scalar_lea.vmem [#allocation5], 256
    %v1394 = vld [vmem:[%s1393] sm:$0xff]
    %v1395 = vld [vmem:[%s1393 + $0x8] sm:$0xff]
    %v1396 = vld [vmem:[%s1393 + $0x10] sm:$0xff]
    %v1397 = vld [vmem:[%s1393 + $0x18] sm:$0xff]
    %v1398 = vld [vmem:[%s1393 + $0x20] sm:$0xff]
    %v1399 = vld [vmem:[%s1393 + $0x28] sm:$0xff]
    %v1400 = vld [vmem:[%s1393 + $0x30] sm:$0xff]
    %v1401 = vld [vmem:[%s1393 + $0x38] sm:$0xff]
    %v1402 = vld [vmem:[%s1393 + $0x40] sm:$0xff]
    %v1403 = vld [vmem:[%s1393 + $0x48] sm:$0xff]
    %v1404 = vld [vmem:[%s1393 + $0x50] sm:$0xff]
    %v1405 = vld [vmem:[%s1393 + $0x58] sm:$0xff]
    %v1406 = vld [vmem:[%s1393 + $0x60] sm:$0xff]
    %v1407 = vld [vmem:[%s1393 + $0x68] sm:$0xff]
    %v1408 = vld [vmem:[%s1393 + $0x70] sm:$0xff]
    %v1409 = vld [vmem:[%s1393 + $0x78] sm:$0xff]
    %1410 = vmatprep.subr.mxu0 0.0
    %v1411 = vand.u32 %v1394, 4294901760
    %1412 = vmatpush1.msra.mxu0 %v1411
    %1413 = vmatprep.subr.mxu0 0.0
    %v1414 = vand.u32 %v1395, 4294901760
    %1415 = vmatpush1.msra.mxu0 %v1414
    %1416 = vmatprep.subr.mxu0 0.0
    %v1417 = vand.u32 %v1396, 4294901760
    %1418 = vmatpush1.msra.mxu0 %v1417
    %1419 = vmatprep.subr.mxu0 0.0
    %v1420 = vand.u32 %v1397, 4294901760
    %1421 = vmatpush1.msra.mxu0 %v1420
    %1422 = vmatprep.subr.mxu0 0.0
    %v1423 = vand.u32 %v1398, 4294901760
    %1424 = vmatpush1.msra.mxu0 %v1423
    %1425 = vmatprep.subr.mxu0 0.0
    %v1426 = vand.u32 %v1399, 4294901760
    %1427 = vmatpush1.msra.mxu0 %v1426
    %1428 = vmatprep.subr.mxu0 0.0
    %v1429 = vand.u32 %v1400, 4294901760
    %1430 = vmatpush1.msra.mxu0 %v1429
    %1431 = vmatprep.subr.mxu0 0.0
    %v1432 = vand.u32 %v1401, 4294901760
    %1433 = vmatpush1.msra.mxu0 %v1432
    %1434 = vmatprep.subr.mxu0 0.0
    %v1435 = vand.u32 %v1402, 4294901760
    %1436 = vmatpush1.msra.mxu0 %v1435
    %1437 = vmatprep.subr.mxu0 0.0
    %v1438 = vand.u32 %v1403, 4294901760
    %1439 = vmatpush1.msra.mxu0 %v1438
    %1440 = vmatprep.subr.mxu0 0.0
    %v1441 = vand.u32 %v1404, 4294901760
    %1442 = vmatpush1.msra.mxu0 %v1441
    %1443 = vmatprep.subr.mxu0 0.0
    %v1444 = vand.u32 %v1405, 4294901760
    %1445 = vmatpush1.msra.mxu0 %v1444
    %1446 = vmatprep.subr.mxu0 0.0
    %v1447 = vand.u32 %v1406, 4294901760
    %1448 = vmatpush1.msra.mxu0 %v1447
    %1449 = vmatprep.subr.mxu0 0.0
    %v1450 = vand.u32 %v1407, 4294901760
    %1451 = vmatpush1.msra.mxu0 %v1450
    %1452 = vmatprep.subr.mxu0 0.0
    %v1453 = vand.u32 %v1408, 4294901760
    %1454 = vmatpush1.msra.mxu0 %v1453
    %1455 = vmatprep.subr.mxu0 0.0
    %v1456 = vand.u32 %v1409, 4294901760
    %1457 = vmatpush1.msra.mxu0 %v1456
    %1458 = vmatprep.subr.mxu0 0.0
    %1459 = vmatpush1.msra.mxu0 0.0
    %1460 = vmatprep.subr.mxu0 0.0
    %1461 = vmatpush1.msra.mxu0 0.0
    %1462 = vmatprep.subr.mxu0 0.0
    %1463 = vmatpush1.msra.mxu0 0.0
    %1464 = vmatprep.subr.mxu0 0.0
    %1465 = vmatpush1.msra.mxu0 0.0
    %1466 = vmatprep.subr.mxu0 0.0
    %1467 = vmatpush1.msra.mxu0 0.0
    %1468 = vmatprep.subr.mxu0 0.0
    %1469 = vmatpush1.msra.mxu0 0.0
    %1470 = vmatprep.subr.mxu0 0.0
    %1471 = vmatpush1.msra.mxu0 0.0
    %1472 = vmatprep.subr.mxu0 0.0
    %1473 = vmatpush1.msra.mxu0 0.0
    %1474 = vmatprep.subr.mxu0 0.0
    %1475 = vmatpush1.msra.mxu0 0.0
    %1476 = vmatprep.subr.mxu0 0.0
    %1477 = vmatpush1.msra.mxu0 0.0
    %1478 = vmatprep.subr.mxu0 0.0
    %1479 = vmatpush1.msra.mxu0 0.0
    %1480 = vmatprep.subr.mxu0 0.0
    %1481 = vmatpush1.msra.mxu0 0.0
    %1482 = vmatprep.subr.mxu0 0.0
    %1483 = vmatpush1.msra.mxu0 0.0
    %1484 = vmatprep.subr.mxu0 0.0
    %1485 = vmatpush1.msra.mxu0 0.0
    %1486 = vmatprep.subr.mxu0 0.0
    %1487 = vmatpush1.msra.mxu0 0.0
    %1488 = vmatprep.subr.mxu0 0.0
    %1489 = vmatpush1.msra.mxu0 0.0
    %1490 = vmatprep.mubr.f32.mxu0 0.0
    %v1491 = vand.u32 %v1392, 4294901760
    %v1492 = vsub.f32 %v1392, %v1491
    %v1493 = vand.u32 %v1492, 4294901760
    %v1494 = vsub.f32 %v1492, %v1493
    %v1495 = vand.u32 %v1494, 4294901760
    %1496 = vmatmul.mubr.f32.gmra.mrb[0].mxu0 %v1495
    %v1497 = vpop.f32.mrb[0].mxu0
    %v1498 = vadd.f32 0.0, %v1497
    %v1499 = vpop.f32.mrb[0].mxu0
    %1500 = vdwg.mxu0
    %1501 = vmatprep.subr.mxu0 0.0
    %v1502 = vand.u32 %v1394, 4294901760
    %v1503 = vsub.f32 %v1394, %v1502
    %v1504 = vand.u32 %v1503, 4294901760
    %v1505 = vsub.f32 %v1503, %v1504
    %v1506 = vand.u32 %v1505, 4294901760
    %1507 = vmatpush1.msra.mxu0 %v1506
    %1508 = vmatprep.subr.mxu0 0.0
    %v1509 = vand.u32 %v1395, 4294901760
    %v1510 = vsub.f32 %v1395, %v1509
    %v1511 = vand.u32 %v1510, 4294901760
    %v1512 = vsub.f32 %v1510, %v1511
    %v1513 = vand.u32 %v1512, 4294901760
    %1514 = vmatpush1.msra.mxu0 %v1513
    %1515 = vmatprep.subr.mxu0 0.0
    %v1516 = vand.u32 %v1396, 4294901760
    %v1517 = vsub.f32 %v1396, %v1516
    %v1518 = vand.u32 %v1517, 4294901760
    %v1519 = vsub.f32 %v1517, %v1518
    %v1520 = vand.u32 %v1519, 4294901760
    %1521 = vmatpush1.msra.mxu0 %v1520
    %1522 = vmatprep.subr.mxu0 0.0
    %v1523 = vand.u32 %v1397, 4294901760
    %v1524 = vsub.f32 %v1397, %v1523
    %v1525 = vand.u32 %v1524, 4294901760
    %v1526 = vsub.f32 %v1524, %v1525
    %v1527 = vand.u32 %v1526, 4294901760
    %1528 = vmatpush1.msra.mxu0 %v1527
    %1529 = vmatprep.subr.mxu0 0.0
    %v1530 = vand.u32 %v1398, 4294901760
    %v1531 = vsub.f32 %v1398, %v1530
    %v1532 = vand.u32 %v1531, 4294901760
    %v1533 = vsub.f32 %v1531, %v1532
    %v1534 = vand.u32 %v1533, 4294901760
    %1535 = vmatpush1.msra.mxu0 %v1534
    %1536 = vmatprep.subr.mxu0 0.0
    %v1537 = vand.u32 %v1399, 4294901760
    %v1538 = vsub.f32 %v1399, %v1537
    %v1539 = vand.u32 %v1538, 4294901760
    %v1540 = vsub.f32 %v1538, %v1539
    %v1541 = vand.u32 %v1540, 4294901760
    %1542 = vmatpush1.msra.mxu0 %v1541
    %1543 = vmatprep.subr.mxu0 0.0
    %v1544 = vand.u32 %v1400, 4294901760
    %v1545 = vsub.f32 %v1400, %v1544
    %v1546 = vand.u32 %v1545, 4294901760
    %v1547 = vsub.f32 %v1545, %v1546
    %v1548 = vand.u32 %v1547, 4294901760
    %1549 = vmatpush1.msra.mxu0 %v1548
    %1550 = vmatprep.subr.mxu0 0.0
    %v1551 = vand.u32 %v1401, 4294901760
    %v1552 = vsub.f32 %v1401, %v1551
    %v1553 = vand.u32 %v1552, 4294901760
    %v1554 = vsub.f32 %v1552, %v1553
    %v1555 = vand.u32 %v1554, 4294901760
    %1556 = vmatpush1.msra.mxu0 %v1555
    %1557 = vmatprep.subr.mxu0 0.0
    %v1558 = vand.u32 %v1402, 4294901760
    %v1559 = vsub.f32 %v1402, %v1558
    %v1560 = vand.u32 %v1559, 4294901760
    %v1561 = vsub.f32 %v1559, %v1560
    %v1562 = vand.u32 %v1561, 4294901760
    %1563 = vmatpush1.msra.mxu0 %v1562
    %1564 = vmatprep.subr.mxu0 0.0
    %v1565 = vand.u32 %v1403, 4294901760
    %v1566 = vsub.f32 %v1403, %v1565
    %v1567 = vand.u32 %v1566, 4294901760
    %v1568 = vsub.f32 %v1566, %v1567
    %v1569 = vand.u32 %v1568, 4294901760
    %1570 = vmatpush1.msra.mxu0 %v1569
    %1571 = vmatprep.subr.mxu0 0.0
    %v1572 = vand.u32 %v1404, 4294901760
    %v1573 = vsub.f32 %v1404, %v1572
    %v1574 = vand.u32 %v1573, 4294901760
    %v1575 = vsub.f32 %v1573, %v1574
    %v1576 = vand.u32 %v1575, 4294901760
    %1577 = vmatpush1.msra.mxu0 %v1576
    %1578 = vmatprep.subr.mxu0 0.0
    %v1579 = vand.u32 %v1405, 4294901760
    %v1580 = vsub.f32 %v1405, %v1579
    %v1581 = vand.u32 %v1580, 4294901760
    %v1582 = vsub.f32 %v1580, %v1581
    %v1583 = vand.u32 %v1582, 4294901760
    %1584 = vmatpush1.msra.mxu0 %v1583
    %1585 = vmatprep.subr.mxu0 0.0
    %v1586 = vand.u32 %v1406, 4294901760
    %v1587 = vsub.f32 %v1406, %v1586
    %v1588 = vand.u32 %v1587, 4294901760
    %v1589 = vsub.f32 %v1587, %v1588
    %v1590 = vand.u32 %v1589, 4294901760
    %1591 = vmatpush1.msra.mxu0 %v1590
    %1592 = vmatprep.subr.mxu0 0.0
    %v1593 = vand.u32 %v1407, 4294901760
    %v1594 = vsub.f32 %v1407, %v1593
    %v1595 = vand.u32 %v1594, 4294901760
    %v1596 = vsub.f32 %v1594, %v1595
    %v1597 = vand.u32 %v1596, 4294901760
    %1598 = vmatpush1.msra.mxu0 %v1597
    %1599 = vmatprep.subr.mxu0 0.0
    %v1600 = vand.u32 %v1408, 4294901760
    %v1601 = vsub.f32 %v1408, %v1600
    %v1602 = vand.u32 %v1601, 4294901760
    %v1603 = vsub.f32 %v1601, %v1602
    %v1604 = vand.u32 %v1603, 4294901760
    %1605 = vmatpush1.msra.mxu0 %v1604
    %1606 = vmatprep.subr.mxu0 0.0
    %v1607 = vand.u32 %v1409, 4294901760
    %v1608 = vsub.f32 %v1409, %v1607
    %v1609 = vand.u32 %v1608, 4294901760
    %v1610 = vsub.f32 %v1608, %v1609
    %v1611 = vand.u32 %v1610, 4294901760
    %1612 = vmatpush1.msra.mxu0 %v1611
    %1613 = vmatprep.subr.mxu0 0.0
    %1614 = vmatpush1.msra.mxu0 0.0
    %1615 = vmatprep.subr.mxu0 0.0
    %1616 = vmatpush1.msra.mxu0 0.0
    %1617 = vmatprep.subr.mxu0 0.0
    %1618 = vmatpush1.msra.mxu0 0.0
    %1619 = vmatprep.subr.mxu0 0.0
    %1620 = vmatpush1.msra.mxu0 0.0
    %1621 = vmatprep.subr.mxu0 0.0
    %1622 = vmatpush1.msra.mxu0 0.0
    %1623 = vmatprep.subr.mxu0 0.0
    %1624 = vmatpush1.msra.mxu0 0.0
    %1625 = vmatprep.subr.mxu0 0.0
    %1626 = vmatpush1.msra.mxu0 0.0
    %1627 = vmatprep.subr.mxu0 0.0
    %1628 = vmatpush1.msra.mxu0 0.0
    %1629 = vmatprep.subr.mxu0 0.0
    %1630 = vmatpush1.msra.mxu0 0.0
    %1631 = vmatprep.subr.mxu0 0.0
    %1632 = vmatpush1.msra.mxu0 0.0
    %1633 = vmatprep.subr.mxu0 0.0
    %1634 = vmatpush1.msra.mxu0 0.0
    %1635 = vmatprep.subr.mxu0 0.0
    %1636 = vmatpush1.msra.mxu0 0.0
    %1637 = vmatprep.subr.mxu0 0.0
    %1638 = vmatpush1.msra.mxu0 0.0
    %1639 = vmatprep.subr.mxu0 0.0
    %1640 = vmatpush1.msra.mxu0 0.0
    %1641 = vmatprep.subr.mxu0 0.0
    %1642 = vmatpush1.msra.mxu0 0.0
    %1643 = vmatprep.subr.mxu0 0.0
    %1644 = vmatpush1.msra.mxu0 0.0
    %1645 = vmatprep.mubr.f32.mxu0 0.0
    %v1646 = vand.u32 %v1392, 4294901760
    %1647 = vmatmul.mubr.f32.gmra.mrb[0].mxu0 %v1646
    %v1648 = vpop.f32.mrb[0].mxu0
    %v1649 = vadd.f32 %v1498, %v1648
    %v1650 = vpop.f32.mrb[0].mxu0
    %1651 = vdwg.mxu0
    %1652 = vmatprep.subr.mxu0 0.0
    %v1653 = vand.u32 %v1394, 4294901760
    %v1654 = vsub.f32 %v1394, %v1653
    %1655 = vmatpush1.msra.mxu0 %v1654
    %1656 = vmatprep.subr.mxu0 0.0
    %v1657 = vand.u32 %v1395, 4294901760
    %v1658 = vsub.f32 %v1395, %v1657
    %1659 = vmatpush1.msra.mxu0 %v1658
    %1660 = vmatprep.subr.mxu0 0.0
    %v1661 = vand.u32 %v1396, 4294901760
    %v1662 = vsub.f32 %v1396, %v1661
    %1663 = vmatpush1.msra.mxu0 %v1662
    %1664 = vmatprep.subr.mxu0 0.0
    %v1665 = vand.u32 %v1397, 4294901760
    %v1666 = vsub.f32 %v1397, %v1665
    %1667 = vmatpush1.msra.mxu0 %v1666
    %1668 = vmatprep.subr.mxu0 0.0
    %v1669 = vand.u32 %v1398, 4294901760
    %v1670 = vsub.f32 %v1398, %v1669
    %1671 = vmatpush1.msra.mxu0 %v1670
    %1672 = vmatprep.subr.mxu0 0.0
    %v1673 = vand.u32 %v1399, 4294901760
    %v1674 = vsub.f32 %v1399, %v1673
    %1675 = vmatpush1.msra.mxu0 %v1674
    %1676 = vmatprep.subr.mxu0 0.0
    %v1677 = vand.u32 %v1400, 4294901760
    %v1678 = vsub.f32 %v1400, %v1677
    %1679 = vmatpush1.msra.mxu0 %v1678
    %1680 = vmatprep.subr.mxu0 0.0
    %v1681 = vand.u32 %v1401, 4294901760
    %v1682 = vsub.f32 %v1401, %v1681
    %1683 = vmatpush1.msra.mxu0 %v1682
    %1684 = vmatprep.subr.mxu0 0.0
    %v1685 = vand.u32 %v1402, 4294901760
    %v1686 = vsub.f32 %v1402, %v1685
    %1687 = vmatpush1.msra.mxu0 %v1686
    %1688 = vmatprep.subr.mxu0 0.0
    %v1689 = vand.u32 %v1403, 4294901760
    %v1690 = vsub.f32 %v1403, %v1689
    %1691 = vmatpush1.msra.mxu0 %v1690
    %1692 = vmatprep.subr.mxu0 0.0
    %v1693 = vand.u32 %v1404, 4294901760
    %v1694 = vsub.f32 %v1404, %v1693
    %1695 = vmatpush1.msra.mxu0 %v1694
    %1696 = vmatprep.subr.mxu0 0.0
    %v1697 = vand.u32 %v1405, 4294901760
    %v1698 = vsub.f32 %v1405, %v1697
    %1699 = vmatpush1.msra.mxu0 %v1698
    %1700 = vmatprep.subr.mxu0 0.0
    %v1701 = vand.u32 %v1406, 4294901760
    %v1702 = vsub.f32 %v1406, %v1701
    %1703 = vmatpush1.msra.mxu0 %v1702
    %1704 = vmatprep.subr.mxu0 0.0
    %v1705 = vand.u32 %v1407, 4294901760
    %v1706 = vsub.f32 %v1407, %v1705
    %1707 = vmatpush1.msra.mxu0 %v1706
    %1708 = vmatprep.subr.mxu0 0.0
    %v1709 = vand.u32 %v1408, 4294901760
    %v1710 = vsub.f32 %v1408, %v1709
    %1711 = vmatpush1.msra.mxu0 %v1710
    %1712 = vmatprep.subr.mxu0 0.0
    %v1713 = vand.u32 %v1409, 4294901760
    %v1714 = vsub.f32 %v1409, %v1713
    %1715 = vmatpush1.msra.mxu0 %v1714
    %1716 = vmatprep.subr.mxu0 0.0
    %1717 = vmatpush1.msra.mxu0 0.0
    %1718 = vmatprep.subr.mxu0 0.0
    %1719 = vmatpush1.msra.mxu0 0.0
    %1720 = vmatprep.subr.mxu0 0.0
    %1721 = vmatpush1.msra.mxu0 0.0
    %1722 = vmatprep.subr.mxu0 0.0
    %1723 = vmatpush1.msra.mxu0 0.0
    %1724 = vmatprep.subr.mxu0 0.0
    %1725 = vmatpush1.msra.mxu0 0.0
    %1726 = vmatprep.subr.mxu0 0.0
    %1727 = vmatpush1.msra.mxu0 0.0
    %1728 = vmatprep.subr.mxu0 0.0
    %1729 = vmatpush1.msra.mxu0 0.0
    %1730 = vmatprep.subr.mxu0 0.0
    %1731 = vmatpush1.msra.mxu0 0.0
    %1732 = vmatprep.subr.mxu0 0.0
    %1733 = vmatpush1.msra.mxu0 0.0
    %1734 = vmatprep.subr.mxu0 0.0
    %1735 = vmatpush1.msra.mxu0 0.0
    %1736 = vmatprep.subr.mxu0 0.0
    %1737 = vmatpush1.msra.mxu0 0.0
    %1738 = vmatprep.subr.mxu0 0.0
    %1739 = vmatpush1.msra.mxu0 0.0
    %1740 = vmatprep.subr.mxu0 0.0
    %1741 = vmatpush1.msra.mxu0 0.0
    %1742 = vmatprep.subr.mxu0 0.0
    %1743 = vmatpush1.msra.mxu0 0.0
    %1744 = vmatprep.subr.mxu0 0.0
    %1745 = vmatpush1.msra.mxu0 0.0
    %1746 = vmatprep.subr.mxu0 0.0
    %1747 = vmatpush1.msra.mxu0 0.0
    %1748 = vmatprep.mubr.f32.mxu0 0.0
    %v1749 = vand.u32 %v1392, 4294901760
    %v1750 = vsub.f32 %v1392, %v1749
    %1751 = vmatmul.mubr.f32.gmra.mrb[0].mxu0 %v1750
    %v1752 = vpop.f32.mrb[0].mxu0
    %v1753 = vadd.f32 %v1649, %v1752
    %v1754 = vpop.f32.mrb[0].mxu0
    %1755 = vdwg.mxu0
    %1756 = vmatprep.subr.mxu0 0.0
    %v1757 = vand.u32 %v1394, 4294901760
    %1758 = vmatpush1.msra.mxu0 %v1757
    %1759 = vmatprep.subr.mxu0 0.0
    %v1760 = vand.u32 %v1395, 4294901760
    %1761 = vmatpush1.msra.mxu0 %v1760
    %1762 = vmatprep.subr.mxu0 0.0
    %v1763 = vand.u32 %v1396, 4294901760
    %1764 = vmatpush1.msra.mxu0 %v1763
    %1765 = vmatprep.subr.mxu0 0.0
    %v1766 = vand.u32 %v1397, 4294901760
    %1767 = vmatpush1.msra.mxu0 %v1766
    %1768 = vmatprep.subr.mxu0 0.0
    %v1769 = vand.u32 %v1398, 4294901760
    %1770 = vmatpush1.msra.mxu0 %v1769
    %1771 = vmatprep.subr.mxu0 0.0
    %v1772 = vand.u32 %v1399, 4294901760
    %1773 = vmatpush1.msra.mxu0 %v1772
    %1774 = vmatprep.subr.mxu0 0.0
    %v1775 = vand.u32 %v1400, 4294901760
    %1776 = vmatpush1.msra.mxu0 %v1775
    %1777 = vmatprep.subr.mxu0 0.0
    %v1778 = vand.u32 %v1401, 4294901760
    %1779 = vmatpush1.msra.mxu0 %v1778
    %1780 = vmatprep.subr.mxu0 0.0
    %v1781 = vand.u32 %v1402, 4294901760
    %1782 = vmatpush1.msra.mxu0 %v1781
    %1783 = vmatprep.subr.mxu0 0.0
    %v1784 = vand.u32 %v1403, 4294901760
    %1785 = vmatpush1.msra.mxu0 %v1784
    %1786 = vmatprep.subr.mxu0 0.0
    %v1787 = vand.u32 %v1404, 4294901760
    %1788 = vmatpush1.msra.mxu0 %v1787
    %1789 = vmatprep.subr.mxu0 0.0
    %v1790 = vand.u32 %v1405, 4294901760
    %1791 = vmatpush1.msra.mxu0 %v1790
    %1792 = vmatprep.subr.mxu0 0.0
    %v1793 = vand.u32 %v1406, 4294901760
    %1794 = vmatpush1.msra.mxu0 %v1793
    %1795 = vmatprep.subr.mxu0 0.0
    %v1796 = vand.u32 %v1407, 4294901760
    %1797 = vmatpush1.msra.mxu0 %v1796
    %1798 = vmatprep.subr.mxu0 0.0
    %v1799 = vand.u32 %v1408, 4294901760
    %1800 = vmatpush1.msra.mxu0 %v1799
    %1801 = vmatprep.subr.mxu0 0.0
    %v1802 = vand.u32 %v1409, 4294901760
    %1803 = vmatpush1.msra.mxu0 %v1802
    %1804 = vmatprep.subr.mxu0 0.0
    %1805 = vmatpush1.msra.mxu0 0.0
    %1806 = vmatprep.subr.mxu0 0.0
    %1807 = vmatpush1.msra.mxu0 0.0
    %1808 = vmatprep.subr.mxu0 0.0
    %1809 = vmatpush1.msra.mxu0 0.0
    %1810 = vmatprep.subr.mxu0 0.0
    %1811 = vmatpush1.msra.mxu0 0.0
    %1812 = vmatprep.subr.mxu0 0.0
    %1813 = vmatpush1.msra.mxu0 0.0
    %1814 = vmatprep.subr.mxu0 0.0
    %1815 = vmatpush1.msra.mxu0 0.0
    %1816 = vmatprep.subr.mxu0 0.0
    %1817 = vmatpush1.msra.mxu0 0.0
    %1818 = vmatprep.subr.mxu0 0.0
    %1819 = vmatpush1.msra.mxu0 0.0
    %1820 = vmatprep.subr.mxu0 0.0
    %1821 = vmatpush1.msra.mxu0 0.0
    %1822 = vmatprep.subr.mxu0 0.0
    %1823 = vmatpush1.msra.mxu0 0.0
    %1824 = vmatprep.subr.mxu0 0.0
    %1825 = vmatpush1.msra.mxu0 0.0
    %1826 = vmatprep.subr.mxu0 0.0
    %1827 = vmatpush1.msra.mxu0 0.0
    %1828 = vmatprep.subr.mxu0 0.0
    %1829 = vmatpush1.msra.mxu0 0.0
    %1830 = vmatprep.subr.mxu0 0.0
    %1831 = vmatpush1.msra.mxu0 0.0
    %1832 = vmatprep.subr.mxu0 0.0
    %1833 = vmatpush1.msra.mxu0 0.0
    %1834 = vmatprep.subr.mxu0 0.0
    %1835 = vmatpush1.msra.mxu0 0.0
    %1836 = vmatprep.mubr.f32.mxu0 0.0
    %v1837 = vand.u32 %v1392, 4294901760
    %v1838 = vsub.f32 %v1392, %v1837
    %v1839 = vand.u32 %v1838, 4294901760
    %1840 = vmatmul.mubr.f32.gmra.mrb[0].mxu0 %v1839
    %v1841 = vpop.f32.mrb[0].mxu0
    %v1842 = vadd.f32 %v1753, %v1841
    %v1843 = vpop.f32.mrb[0].mxu0
    %1844 = vdwg.mxu0
    %1845 = vmatprep.subr.mxu0 0.0
    %v1846 = vand.u32 %v1394, 4294901760
    %v1847 = vsub.f32 %v1394, %v1846
    %v1848 = vand.u32 %v1847, 4294901760
    %1849 = vmatpush1.msra.mxu0 %v1848
    %1850 = vmatprep.subr.mxu0 0.0
    %v1851 = vand.u32 %v1395, 4294901760
    %v1852 = vsub.f32 %v1395, %v1851
    %v1853 = vand.u32 %v1852, 4294901760
    %1854 = vmatpush1.msra.mxu0 %v1853
    %1855 = vmatprep.subr.mxu0 0.0
    %v1856 = vand.u32 %v1396, 4294901760
    %v1857 = vsub.f32 %v1396, %v1856
    %v1858 = vand.u32 %v1857, 4294901760
    %1859 = vmatpush1.msra.mxu0 %v1858
    %1860 = vmatprep.subr.mxu0 0.0
    %v1861 = vand.u32 %v1397, 4294901760
    %v1862 = vsub.f32 %v1397, %v1861
    %v1863 = vand.u32 %v1862, 4294901760
    %1864 = vmatpush1.msra.mxu0 %v1863
    %1865 = vmatprep.subr.mxu0 0.0
    %v1866 = vand.u32 %v1398, 4294901760
    %v1867 = vsub.f32 %v1398, %v1866
    %v1868 = vand.u32 %v1867, 4294901760
    %1869 = vmatpush1.msra.mxu0 %v1868
    %1870 = vmatprep.subr.mxu0 0.0
    %v1871 = vand.u32 %v1399, 4294901760
    %v1872 = vsub.f32 %v1399, %v1871
    %v1873 = vand.u32 %v1872, 4294901760
    %1874 = vmatpush1.msra.mxu0 %v1873
    %1875 = vmatprep.subr.mxu0 0.0
    %v1876 = vand.u32 %v1400, 4294901760
    %v1877 = vsub.f32 %v1400, %v1876
    %v1878 = vand.u32 %v1877, 4294901760
    %1879 = vmatpush1.msra.mxu0 %v1878
    %1880 = vmatprep.subr.mxu0 0.0
    %v1881 = vand.u32 %v1401, 4294901760
    %v1882 = vsub.f32 %v1401, %v1881
    %v1883 = vand.u32 %v1882, 4294901760
    %1884 = vmatpush1.msra.mxu0 %v1883
    %1885 = vmatprep.subr.mxu0 0.0
    %v1886 = vand.u32 %v1402, 4294901760
    %v1887 = vsub.f32 %v1402, %v1886
    %v1888 = vand.u32 %v1887, 4294901760
    %1889 = vmatpush1.msra.mxu0 %v1888
    %1890 = vmatprep.subr.mxu0 0.0
    %v1891 = vand.u32 %v1403, 4294901760
    %v1892 = vsub.f32 %v1403, %v1891
    %v1893 = vand.u32 %v1892, 4294901760
    %1894 = vmatpush1.msra.mxu0 %v1893
    %1895 = vmatprep.subr.mxu0 0.0
    %v1896 = vand.u32 %v1404, 4294901760
    %v1897 = vsub.f32 %v1404, %v1896
    %v1898 = vand.u32 %v1897, 4294901760
    %1899 = vmatpush1.msra.mxu0 %v1898
    %1900 = vmatprep.subr.mxu0 0.0
    %v1901 = vand.u32 %v1405, 4294901760
    %v1902 = vsub.f32 %v1405, %v1901
    %v1903 = vand.u32 %v1902, 4294901760
    %1904 = vmatpush1.msra.mxu0 %v1903
    %1905 = vmatprep.subr.mxu0 0.0
    %v1906 = vand.u32 %v1406, 4294901760
    %v1907 = vsub.f32 %v1406, %v1906
    %v1908 = vand.u32 %v1907, 4294901760
    %1909 = vmatpush1.msra.mxu0 %v1908
    %1910 = vmatprep.subr.mxu0 0.0
    %v1911 = vand.u32 %v1407, 4294901760
    %v1912 = vsub.f32 %v1407, %v1911
    %v1913 = vand.u32 %v1912, 4294901760
    %1914 = vmatpush1.msra.mxu0 %v1913
    %1915 = vmatprep.subr.mxu0 0.0
    %v1916 = vand.u32 %v1408, 4294901760
    %v1917 = vsub.f32 %v1408, %v1916
    %v1918 = vand.u32 %v1917, 4294901760
    %1919 = vmatpush1.msra.mxu0 %v1918
    %1920 = vmatprep.subr.mxu0 0.0
    %v1921 = vand.u32 %v1409, 4294901760
    %v1922 = vsub.f32 %v1409, %v1921
    %v1923 = vand.u32 %v1922, 4294901760
    %1924 = vmatpush1.msra.mxu0 %v1923
    %1925 = vmatprep.subr.mxu0 0.0
    %1926 = vmatpush1.msra.mxu0 0.0
    %1927 = vmatprep.subr.mxu0 0.0
    %1928 = vmatpush1.msra.mxu0 0.0
    %1929 = vmatprep.subr.mxu0 0.0
    %1930 = vmatpush1.msra.mxu0 0.0
    %1931 = vmatprep.subr.mxu0 0.0
    %1932 = vmatpush1.msra.mxu0 0.0
    %1933 = vmatprep.subr.mxu0 0.0
    %1934 = vmatpush1.msra.mxu0 0.0
    %1935 = vmatprep.subr.mxu0 0.0
    %1936 = vmatpush1.msra.mxu0 0.0
    %1937 = vmatprep.subr.mxu0 0.0
    %1938 = vmatpush1.msra.mxu0 0.0
    %1939 = vmatprep.subr.mxu0 0.0
    %1940 = vmatpush1.msra.mxu0 0.0
    %1941 = vmatprep.subr.mxu0 0.0
    %1942 = vmatpush1.msra.mxu0 0.0
    %1943 = vmatprep.subr.mxu0 0.0
    %1944 = vmatpush1.msra.mxu0 0.0
    %1945 = vmatprep.subr.mxu0 0.0
    %1946 = vmatpush1.msra.mxu0 0.0
    %1947 = vmatprep.subr.mxu0 0.0
    %1948 = vmatpush1.msra.mxu0 0.0
    %1949 = vmatprep.subr.mxu0 0.0
    %1950 = vmatpush1.msra.mxu0 0.0
    %1951 = vmatprep.subr.mxu0 0.0
    %1952 = vmatpush1.msra.mxu0 0.0
    %1953 = vmatprep.subr.mxu0 0.0
    %1954 = vmatpush1.msra.mxu0 0.0
    %1955 = vmatprep.subr.mxu0 0.0
    %1956 = vmatpush1.msra.mxu0 0.0
    %1957 = vmatprep.mubr.f32.mxu0 0.0
    %v1958 = vand.u32 %v1392, 4294901760
    %1959 = vmatmul.mubr.f32.gmra.mrb[0].mxu0 %v1958
    %v1960 = vpop.f32.mrb[0].mxu0
    %v1961 = vadd.f32 %v1842, %v1960
    %v1962 = vpop.f32.mrb[0].mxu0
    %1963 = vdwg.mxu0
    %1964 = vmatprep.subr.mxu0 0.0
    %v1965 = vand.u32 %v1394, 4294901760
    %1966 = vmatpush1.msra.mxu0 %v1965
    %1967 = vmatprep.subr.mxu0 0.0
    %v1968 = vand.u32 %v1395, 4294901760
    %1969 = vmatpush1.msra.mxu0 %v1968
    %1970 = vmatprep.subr.mxu0 0.0
    %v1971 = vand.u32 %v1396, 4294901760
    %1972 = vmatpush1.msra.mxu0 %v1971
    %1973 = vmatprep.subr.mxu0 0.0
    %v1974 = vand.u32 %v1397, 4294901760
    %1975 = vmatpush1.msra.mxu0 %v1974
    %1976 = vmatprep.subr.mxu0 0.0
    %v1977 = vand.u32 %v1398, 4294901760
    %1978 = vmatpush1.msra.mxu0 %v1977
    %1979 = vmatprep.subr.mxu0 0.0
    %v1980 = vand.u32 %v1399, 4294901760
    %1981 = vmatpush1.msra.mxu0 %v1980
    %1982 = vmatprep.subr.mxu0 0.0
    %v1983 = vand.u32 %v1400, 4294901760
    %1984 = vmatpush1.msra.mxu0 %v1983
    %1985 = vmatprep.subr.mxu0 0.0
    %v1986 = vand.u32 %v1401, 4294901760
    %1987 = vmatpush1.msra.mxu0 %v1986
    %1988 = vmatprep.subr.mxu0 0.0
    %v1989 = vand.u32 %v1402, 4294901760
    %1990 = vmatpush1.msra.mxu0 %v1989
    %1991 = vmatprep.subr.mxu0 0.0
    %v1992 = vand.u32 %v1403, 4294901760
    %1993 = vmatpush1.msra.mxu0 %v1992
    %1994 = vmatprep.subr.mxu0 0.0
    %v1995 = vand.u32 %v1404, 4294901760
    %1996 = vmatpush1.msra.mxu0 %v1995
    %1997 = vmatprep.subr.mxu0 0.0
    %v1998 = vand.u32 %v1405, 4294901760
    %1999 = vmatpush1.msra.mxu0 %v1998
    %2000 = vmatprep.subr.mxu0 0.0
    %v2001 = vand.u32 %v1406, 4294901760
    %2002 = vmatpush1.msra.mxu0 %v2001
    %2003 = vmatprep.subr.mxu0 0.0
    %v2004 = vand.u32 %v1407, 4294901760
    %2005 = vmatpush1.msra.mxu0 %v2004
    %2006 = vmatprep.subr.mxu0 0.0
    %v2007 = vand.u32 %v1408, 4294901760
    %2008 = vmatpush1.msra.mxu0 %v2007
    %2009 = vmatprep.subr.mxu0 0.0
    %v2010 = vand.u32 %v1409, 4294901760
    %2011 = vmatpush1.msra.mxu0 %v2010
    %2012 = vmatprep.subr.mxu0 0.0
    %2013 = vmatpush1.msra.mxu0 0.0
    %2014 = vmatprep.subr.mxu0 0.0
    %2015 = vmatpush1.msra.mxu0 0.0
    %2016 = vmatprep.subr.mxu0 0.0
    %2017 = vmatpush1.msra.mxu0 0.0
    %2018 = vmatprep.subr.mxu0 0.0
    %2019 = vmatpush1.msra.mxu0 0.0
    %2020 = vmatprep.subr.mxu0 0.0
    %2021 = vmatpush1.msra.mxu0 0.0
    %2022 = vmatprep.subr.mxu0 0.0
    %2023 = vmatpush1.msra.mxu0 0.0
    %2024 = vmatprep.subr.mxu0 0.0
    %2025 = vmatpush1.msra.mxu0 0.0
    %2026 = vmatprep.subr.mxu0 0.0
    %2027 = vmatpush1.msra.mxu0 0.0
    %2028 = vmatprep.subr.mxu0 0.0
    %2029 = vmatpush1.msra.mxu0 0.0
    %2030 = vmatprep.subr.mxu0 0.0
    %2031 = vmatpush1.msra.mxu0 0.0
    %2032 = vmatprep.subr.mxu0 0.0
    %2033 = vmatpush1.msra.mxu0 0.0
    %2034 = vmatprep.subr.mxu0 0.0
    %2035 = vmatpush1.msra.mxu0 0.0
    %2036 = vmatprep.subr.mxu0 0.0
    %2037 = vmatpush1.msra.mxu0 0.0
    %2038 = vmatprep.subr.mxu0 0.0
    %2039 = vmatpush1.msra.mxu0 0.0
    %2040 = vmatprep.subr.mxu0 0.0
    %2041 = vmatpush1.msra.mxu0 0.0
    %2042 = vmatprep.subr.mxu0 0.0
    %2043 = vmatpush1.msra.mxu0 0.0
    %2044 = vmatprep.mubr.f32.mxu0 0.0
    %v2045 = vand.u32 %v1392, 4294901760
    %2046 = vmatmul.mubr.f32.gmra.mrb[0].mxu0 %v2045
    %v2047 = vpop.f32.mrb[0].mxu0
    %v2048 = vadd.f32 %v1961, %v2047
    %v2049 = vpop.f32.mrb[0].mxu0
    %2050 = vdwg.mxu0
    %v2051 = vmul.f32 %v2048, 0.00088388345
    %s2052 = scalar_lea.vmem %s3, 2
    %v2053 = vld [vmem:[%s2052] sm:$0x1]
    %v2055 = vlaneseq
    %v2056 = vshrl.u32 %v2055, 7
    %v2057 = vsub.s32 0, %v2056
    %v2058 = vrot.slane %v2053, %v2057
    %v2060 = vadd.f32 %v2051, %v2058
    %vm2061 = vcmp.ge.f32.partialorder %v2060, 0.0
    %v2062 = vsel %vm2061, 1.4142135, 0.28284273
    %v2063 = vmul.f32 %v2060, %v2062
    %s2064 = scalar_lea.vmem [#allocation5], 384
    %v2065 = vld [vmem:[%s2064] sm:$0xff]
    %v2066 = vld [vmem:[%s2064 + $0x8] sm:$0xff]
    %v2067 = vld [vmem:[%s2064 + $0x10] sm:$0xff]
    %v2068 = vld [vmem:[%s2064 + $0x18] sm:$0xff]
    %v2069 = vld [vmem:[%s2064 + $0x20] sm:$0xff]
    %v2070 = vld [vmem:[%s2064 + $0x28] sm:$0xff]
    %v2071 = vld [vmem:[%s2064 + $0x30] sm:$0xff]
    %v2072 = vld [vmem:[%s2064 + $0x38] sm:$0xff]
    %v2073 = vld [vmem:[%s2064 + $0x40] sm:$0xff]
    %v2074 = vld [vmem:[%s2064 + $0x48] sm:$0xff]
    %v2075 = vld [vmem:[%s2064 + $0x50] sm:$0xff]
    %v2076 = vld [vmem:[%s2064 + $0x58] sm:$0xff]
    %v2077 = vld [vmem:[%s2064 + $0x60] sm:$0xff]
    %v2078 = vld [vmem:[%s2064 + $0x68] sm:$0xff]
    %v2079 = vld [vmem:[%s2064 + $0x70] sm:$0xff]
    %v2080 = vld [vmem:[%s2064 + $0x78] sm:$0xff]
    %2081 = vmatprep.subr.mxu0 0.0
    %v2082 = vand.u32 %v2065, 4294901760
    %2083 = vmatpush1.msra.mxu0 %v2082
    %2084 = vmatprep.subr.mxu0 0.0
    %v2085 = vand.u32 %v2066, 4294901760
    %2086 = vmatpush1.msra.mxu0 %v2085
    %2087 = vmatprep.subr.mxu0 0.0
    %v2088 = vand.u32 %v2067, 4294901760
    %2089 = vmatpush1.msra.mxu0 %v2088
    %2090 = vmatprep.subr.mxu0 0.0
    %v2091 = vand.u32 %v2068, 4294901760
    %2092 = vmatpush1.msra.mxu0 %v2091
    %2093 = vmatprep.subr.mxu0 0.0
    %v2094 = vand.u32 %v2069, 4294901760
    %2095 = vmatpush1.msra.mxu0 %v2094
    %2096 = vmatprep.subr.mxu0 0.0
    %v2097 = vand.u32 %v2070, 4294901760
    %2098 = vmatpush1.msra.mxu0 %v2097
    %2099 = vmatprep.subr.mxu0 0.0
    %v2100 = vand.u32 %v2071, 4294901760
    %2101 = vmatpush1.msra.mxu0 %v2100
    %2102 = vmatprep.subr.mxu0 0.0
    %v2103 = vand.u32 %v2072, 4294901760
    %2104 = vmatpush1.msra.mxu0 %v2103
    %2105 = vmatprep.subr.mxu0 0.0
    %v2106 = vand.u32 %v2073, 4294901760
    %2107 = vmatpush1.msra.mxu0 %v2106
    %2108 = vmatprep.subr.mxu0 0.0
    %v2109 = vand.u32 %v2074, 4294901760
    %2110 = vmatpush1.msra.mxu0 %v2109
    %2111 = vmatprep.subr.mxu0 0.0
    %v2112 = vand.u32 %v2075, 4294901760
    %2113 = vmatpush1.msra.mxu0 %v2112
    %2114 = vmatprep.subr.mxu0 0.0
    %v2115 = vand.u32 %v2076, 4294901760
    %2116 = vmatpush1.msra.mxu0 %v2115
    %2117 = vmatprep.subr.mxu0 0.0
    %v2118 = vand.u32 %v2077, 4294901760
    %2119 = vmatpush1.msra.mxu0 %v2118
    %2120 = vmatprep.subr.mxu0 0.0
    %v2121 = vand.u32 %v2078, 4294901760
    %2122 = vmatpush1.msra.mxu0 %v2121
    %2123 = vmatprep.subr.mxu0 0.0
    %v2124 = vand.u32 %v2079, 4294901760
    %2125 = vmatpush1.msra.mxu0 %v2124
    %2126 = vmatprep.subr.mxu0 0.0
    %v2127 = vand.u32 %v2080, 4294901760
    %2128 = vmatpush1.msra.mxu0 %v2127
    %2129 = vmatprep.subr.mxu0 0.0
    %2130 = vmatpush1.msra.mxu0 0.0
    %2131 = vmatprep.subr.mxu0 0.0
    %2132 = vmatpush1.msra.mxu0 0.0
    %2133 = vmatprep.subr.mxu0 0.0
    %2134 = vmatpush1.msra.mxu0 0.0
    %2135 = vmatprep.subr.mxu0 0.0
    %2136 = vmatpush1.msra.mxu0 0.0
    %2137 = vmatprep.subr.mxu0 0.0
    %2138 = vmatpush1.msra.mxu0 0.0
    %2139 = vmatprep.subr.mxu0 0.0
    %2140 = vmatpush1.msra.mxu0 0.0
    %2141 = vmatprep.subr.mxu0 0.0
    %2142 = vmatpush1.msra.mxu0 0.0
    %2143 = vmatprep.subr.mxu0 0.0
    %2144 = vmatpush1.msra.mxu0 0.0
    %2145 = vmatprep.subr.mxu0 0.0
    %2146 = vmatpush1.msra.mxu0 0.0
    %2147 = vmatprep.subr.mxu0 0.0
    %2148 = vmatpush1.msra.mxu0 0.0
    %2149 = vmatprep.subr.mxu0 0.0
    %2150 = vmatpush1.msra.mxu0 0.0
    %2151 = vmatprep.subr.mxu0 0.0
    %2152 = vmatpush1.msra.mxu0 0.0
    %2153 = vmatprep.subr.mxu0 0.0
    %2154 = vmatpush1.msra.mxu0 0.0
    %2155 = vmatprep.subr.mxu0 0.0
    %2156 = vmatpush1.msra.mxu0 0.0
    %2157 = vmatprep.subr.mxu0 0.0
    %2158 = vmatpush1.msra.mxu0 0.0
    %2159 = vmatprep.subr.mxu0 0.0
    %2160 = vmatpush1.msra.mxu0 0.0
    %2161 = vmatprep.mubr.f32.mxu0 0.0
    %v2162 = vand.u32 %v2063, 4294901760
    %v2163 = vsub.f32 %v2063, %v2162
    %v2164 = vand.u32 %v2163, 4294901760
    %v2165 = vsub.f32 %v2163, %v2164
    %v2166 = vand.u32 %v2165, 4294901760
    %2167 = vmatmul.mubr.f32.gmra.mrb[0].mxu0 %v2166
    %v2168 = vpop.f32.mrb[0].mxu0
    %v2169 = vadd.f32 0.0, %v2168
    %v2170 = vpop.f32.mrb[0].mxu0
    %2171 = vdwg.mxu0
    %2172 = vmatprep.subr.mxu0 0.0
    %v2173 = vand.u32 %v2065, 4294901760
    %v2174 = vsub.f32 %v2065, %v2173
    %v2175 = vand.u32 %v2174, 4294901760
    %v2176 = vsub.f32 %v2174, %v2175
    %v2177 = vand.u32 %v2176, 4294901760
    %2178 = vmatpush1.msra.mxu0 %v2177
    %2179 = vmatprep.subr.mxu0 0.0
    %v2180 = vand.u32 %v2066, 4294901760
    %v2181 = vsub.f32 %v2066, %v2180
    %v2182 = vand.u32 %v2181, 4294901760
    %v2183 = vsub.f32 %v2181, %v2182
    %v2184 = vand.u32 %v2183, 4294901760
    %2185 = vmatpush1.msra.mxu0 %v2184
    %2186 = vmatprep.subr.mxu0 0.0
    %v2187 = vand.u32 %v2067, 4294901760
    %v2188 = vsub.f32 %v2067, %v2187
    %v2189 = vand.u32 %v2188, 4294901760
    %v2190 = vsub.f32 %v2188, %v2189
    %v2191 = vand.u32 %v2190, 4294901760
    %2192 = vmatpush1.msra.mxu0 %v2191
    %2193 = vmatprep.subr.mxu0 0.0
    %v2194 = vand.u32 %v2068, 4294901760
    %v2195 = vsub.f32 %v2068, %v2194
    %v2196 = vand.u32 %v2195, 4294901760
    %v2197 = vsub.f32 %v2195, %v2196
    %v2198 = vand.u32 %v2197, 4294901760
    %2199 = vmatpush1.msra.mxu0 %v2198
    %2200 = vmatprep.subr.mxu0 0.0
    %v2201 = vand.u32 %v2069, 4294901760
    %v2202 = vsub.f32 %v2069, %v2201
    %v2203 = vand.u32 %v2202, 4294901760
    %v2204 = vsub.f32 %v2202, %v2203
    %v2205 = vand.u32 %v2204, 4294901760
    %2206 = vmatpush1.msra.mxu0 %v2205
    %2207 = vmatprep.subr.mxu0 0.0
    %v2208 = vand.u32 %v2070, 4294901760
    %v2209 = vsub.f32 %v2070, %v2208
    %v2210 = vand.u32 %v2209, 4294901760
    %v2211 = vsub.f32 %v2209, %v2210
    %v2212 = vand.u32 %v2211, 4294901760
    %2213 = vmatpush1.msra.mxu0 %v2212
    %2214 = vmatprep.subr.mxu0 0.0
    %v2215 = vand.u32 %v2071, 4294901760
    %v2216 = vsub.f32 %v2071, %v2215
    %v2217 = vand.u32 %v2216, 4294901760
    %v2218 = vsub.f32 %v2216, %v2217
    %v2219 = vand.u32 %v2218, 4294901760
    %2220 = vmatpush1.msra.mxu0 %v2219
    %2221 = vmatprep.subr.mxu0 0.0
    %v2222 = vand.u32 %v2072, 4294901760
    %v2223 = vsub.f32 %v2072, %v2222
    %v2224 = vand.u32 %v2223, 4294901760
    %v2225 = vsub.f32 %v2223, %v2224
    %v2226 = vand.u32 %v2225, 4294901760
    %2227 = vmatpush1.msra.mxu0 %v2226
    %2228 = vmatprep.subr.mxu0 0.0
    %v2229 = vand.u32 %v2073, 4294901760
    %v2230 = vsub.f32 %v2073, %v2229
    %v2231 = vand.u32 %v2230, 4294901760
    %v2232 = vsub.f32 %v2230, %v2231
    %v2233 = vand.u32 %v2232, 4294901760
    %2234 = vmatpush1.msra.mxu0 %v2233
    %2235 = vmatprep.subr.mxu0 0.0
    %v2236 = vand.u32 %v2074, 4294901760
    %v2237 = vsub.f32 %v2074, %v2236
    %v2238 = vand.u32 %v2237, 4294901760
    %v2239 = vsub.f32 %v2237, %v2238
    %v2240 = vand.u32 %v2239, 4294901760
    %2241 = vmatpush1.msra.mxu0 %v2240
    %2242 = vmatprep.subr.mxu0 0.0
    %v2243 = vand.u32 %v2075, 4294901760
    %v2244 = vsub.f32 %v2075, %v2243
    %v2245 = vand.u32 %v2244, 4294901760
    %v2246 = vsub.f32 %v2244, %v2245
    %v2247 = vand.u32 %v2246, 4294901760
    %2248 = vmatpush1.msra.mxu0 %v2247
    %2249 = vmatprep.subr.mxu0 0.0
    %v2250 = vand.u32 %v2076, 4294901760
    %v2251 = vsub.f32 %v2076, %v2250
    %v2252 = vand.u32 %v2251, 4294901760
    %v2253 = vsub.f32 %v2251, %v2252
    %v2254 = vand.u32 %v2253, 4294901760
    %2255 = vmatpush1.msra.mxu0 %v2254
    %2256 = vmatprep.subr.mxu0 0.0
    %v2257 = vand.u32 %v2077, 4294901760
    %v2258 = vsub.f32 %v2077, %v2257
    %v2259 = vand.u32 %v2258, 4294901760
    %v2260 = vsub.f32 %v2258, %v2259
    %v2261 = vand.u32 %v2260, 4294901760
    %2262 = vmatpush1.msra.mxu0 %v2261
    %2263 = vmatprep.subr.mxu0 0.0
    %v2264 = vand.u32 %v2078, 4294901760
    %v2265 = vsub.f32 %v2078, %v2264
    %v2266 = vand.u32 %v2265, 4294901760
    %v2267 = vsub.f32 %v2265, %v2266
    %v2268 = vand.u32 %v2267, 4294901760
    %2269 = vmatpush1.msra.mxu0 %v2268
    %2270 = vmatprep.subr.mxu0 0.0
    %v2271 = vand.u32 %v2079, 4294901760
    %v2272 = vsub.f32 %v2079, %v2271
    %v2273 = vand.u32 %v2272, 4294901760
    %v2274 = vsub.f32 %v2272, %v2273
    %v2275 = vand.u32 %v2274, 4294901760
    %2276 = vmatpush1.msra.mxu0 %v2275
    %2277 = vmatprep.subr.mxu0 0.0
    %v2278 = vand.u32 %v2080, 4294901760
    %v2279 = vsub.f32 %v2080, %v2278
    %v2280 = vand.u32 %v2279, 4294901760
    %v2281 = vsub.f32 %v2279, %v2280
    %v2282 = vand.u32 %v2281, 4294901760
    %2283 = vmatpush1.msra.mxu0 %v2282
    %2284 = vmatprep.subr.mxu0 0.0
    %2285 = vmatpush1.msra.mxu0 0.0
    %2286 = vmatprep.subr.mxu0 0.0
    %2287 = vmatpush1.msra.mxu0 0.0
    %2288 = vmatprep.subr.mxu0 0.0
    %2289 = vmatpush1.msra.mxu0 0.0
    %2290 = vmatprep.subr.mxu0 0.0
    %2291 = vmatpush1.msra.mxu0 0.0
    %2292 = vmatprep.subr.mxu0 0.0
    %2293 = vmatpush1.msra.mxu0 0.0
    %2294 = vmatprep.subr.mxu0 0.0
    %2295 = vmatpush1.msra.mxu0 0.0
    %2296 = vmatprep.subr.mxu0 0.0
    %2297 = vmatpush1.msra.mxu0 0.0
    %2298 = vmatprep.subr.mxu0 0.0
    %2299 = vmatpush1.msra.mxu0 0.0
    %2300 = vmatprep.subr.mxu0 0.0
    %2301 = vmatpush1.msra.mxu0 0.0
    %2302 = vmatprep.subr.mxu0 0.0
    %2303 = vmatpush1.msra.mxu0 0.0
    %2304 = vmatprep.subr.mxu0 0.0
    %2305 = vmatpush1.msra.mxu0 0.0
    %2306 = vmatprep.subr.mxu0 0.0
    %2307 = vmatpush1.msra.mxu0 0.0
    %2308 = vmatprep.subr.mxu0 0.0
    %2309 = vmatpush1.msra.mxu0 0.0
    %2310 = vmatprep.subr.mxu0 0.0
    %2311 = vmatpush1.msra.mxu0 0.0
    %2312 = vmatprep.subr.mxu0 0.0
    %2313 = vmatpush1.msra.mxu0 0.0
    %2314 = vmatprep.subr.mxu0 0.0
    %2315 = vmatpush1.msra.mxu0 0.0
    %2316 = vmatprep.mubr.f32.mxu0 0.0
    %v2317 = vand.u32 %v2063, 4294901760
    %2318 = vmatmul.mubr.f32.gmra.mrb[0].mxu0 %v2317
    %v2319 = vpop.f32.mrb[0].mxu0
    %v2320 = vadd.f32 %v2169, %v2319
    %v2321 = vpop.f32.mrb[0].mxu0
    %2322 = vdwg.mxu0
    %2323 = vmatprep.subr.mxu0 0.0
    %v2324 = vand.u32 %v2065, 4294901760
    %v2325 = vsub.f32 %v2065, %v2324
    %2326 = vmatpush1.msra.mxu0 %v2325
    %2327 = vmatprep.subr.mxu0 0.0
    %v2328 = vand.u32 %v2066, 4294901760
    %v2329 = vsub.f32 %v2066, %v2328
    %2330 = vmatpush1.msra.mxu0 %v2329
    %2331 = vmatprep.subr.mxu0 0.0
    %v2332 = vand.u32 %v2067, 4294901760
    %v2333 = vsub.f32 %v2067, %v2332
    %2334 = vmatpush1.msra.mxu0 %v2333
    %2335 = vmatprep.subr.mxu0 0.0
    %v2336 = vand.u32 %v2068, 4294901760
    %v2337 = vsub.f32 %v2068, %v2336
    %2338 = vmatpush1.msra.mxu0 %v2337
    %2339 = vmatprep.subr.mxu0 0.0
    %v2340 = vand.u32 %v2069, 4294901760
    %v2341 = vsub.f32 %v2069, %v2340
    %2342 = vmatpush1.msra.mxu0 %v2341
    %2343 = vmatprep.subr.mxu0 0.0
    %v2344 = vand.u32 %v2070, 4294901760
    %v2345 = vsub.f32 %v2070, %v2344
    %2346 = vmatpush1.msra.mxu0 %v2345
    %2347 = vmatprep.subr.mxu0 0.0
    %v2348 = vand.u32 %v2071, 4294901760
    %v2349 = vsub.f32 %v2071, %v2348
    %2350 = vmatpush1.msra.mxu0 %v2349
    %2351 = vmatprep.subr.mxu0 0.0
    %v2352 = vand.u32 %v2072, 4294901760
    %v2353 = vsub.f32 %v2072, %v2352
    %2354 = vmatpush1.msra.mxu0 %v2353
    %2355 = vmatprep.subr.mxu0 0.0
    %v2356 = vand.u32 %v2073, 4294901760
    %v2357 = vsub.f32 %v2073, %v2356
    %2358 = vmatpush1.msra.mxu0 %v2357
    %2359 = vmatprep.subr.mxu0 0.0
    %v2360 = vand.u32 %v2074, 4294901760
    %v2361 = vsub.f32 %v2074, %v2360
    %2362 = vmatpush1.msra.mxu0 %v2361
    %2363 = vmatprep.subr.mxu0 0.0
    %v2364 = vand.u32 %v2075, 4294901760
    %v2365 = vsub.f32 %v2075, %v2364
    %2366 = vmatpush1.msra.mxu0 %v2365
    %2367 = vmatprep.subr.mxu0 0.0
    %v2368 = vand.u32 %v2076, 4294901760
    %v2369 = vsub.f32 %v2076, %v2368
    %2370 = vmatpush1.msra.mxu0 %v2369
    %2371 = vmatprep.subr.mxu0 0.0
    %v2372 = vand.u32 %v2077, 4294901760
    %v2373 = vsub.f32 %v2077, %v2372
    %2374 = vmatpush1.msra.mxu0 %v2373
    %2375 = vmatprep.subr.mxu0 0.0
    %v2376 = vand.u32 %v2078, 4294901760
    %v2377 = vsub.f32 %v2078, %v2376
    %2378 = vmatpush1.msra.mxu0 %v2377
    %2379 = vmatprep.subr.mxu0 0.0
    %v2380 = vand.u32 %v2079, 4294901760
    %v2381 = vsub.f32 %v2079, %v2380
    %2382 = vmatpush1.msra.mxu0 %v2381
    %2383 = vmatprep.subr.mxu0 0.0
    %v2384 = vand.u32 %v2080, 4294901760
    %v2385 = vsub.f32 %v2080, %v2384
    %2386 = vmatpush1.msra.mxu0 %v2385
    %2387 = vmatprep.subr.mxu0 0.0
    %2388 = vmatpush1.msra.mxu0 0.0
    %2389 = vmatprep.subr.mxu0 0.0
    %2390 = vmatpush1.msra.mxu0 0.0
    %2391 = vmatprep.subr.mxu0 0.0
    %2392 = vmatpush1.msra.mxu0 0.0
    %2393 = vmatprep.subr.mxu0 0.0
    %2394 = vmatpush1.msra.mxu0 0.0
    %2395 = vmatprep.subr.mxu0 0.0
    %2396 = vmatpush1.msra.mxu0 0.0
    %2397 = vmatprep.subr.mxu0 0.0
    %2398 = vmatpush1.msra.mxu0 0.0
    %2399 = vmatprep.subr.mxu0 0.0
    %2400 = vmatpush1.msra.mxu0 0.0
    %2401 = vmatprep.subr.mxu0 0.0
    %2402 = vmatpush1.msra.mxu0 0.0
    %2403 = vmatprep.subr.mxu0 0.0
    %2404 = vmatpush1.msra.mxu0 0.0
    %2405 = vmatprep.subr.mxu0 0.0
    %2406 = vmatpush1.msra.mxu0 0.0
    %2407 = vmatprep.subr.mxu0 0.0
    %2408 = vmatpush1.msra.mxu0 0.0
    %2409 = vmatprep.subr.mxu0 0.0
    %2410 = vmatpush1.msra.mxu0 0.0
    %2411 = vmatprep.subr.mxu0 0.0
    %2412 = vmatpush1.msra.mxu0 0.0
    %2413 = vmatprep.subr.mxu0 0.0
    %2414 = vmatpush1.msra.mxu0 0.0
    %2415 = vmatprep.subr.mxu0 0.0
    %2416 = vmatpush1.msra.mxu0 0.0
    %2417 = vmatprep.subr.mxu0 0.0
    %2418 = vmatpush1.msra.mxu0 0.0
    %2419 = vmatprep.mubr.f32.mxu0 0.0
    %v2420 = vand.u32 %v2063, 4294901760
    %v2421 = vsub.f32 %v2063, %v2420
    %2422 = vmatmul.mubr.f32.gmra.mrb[0].mxu0 %v2421
    %v2423 = vpop.f32.mrb[0].mxu0
    %v2424 = vadd.f32 %v2320, %v2423
    %v2425 = vpop.f32.mrb[0].mxu0
    %2426 = vdwg.mxu0
    %2427 = vmatprep.subr.mxu0 0.0
    %v2428 = vand.u32 %v2065, 4294901760
    %2429 = vmatpush1.msra.mxu0 %v2428
    %2430 = vmatprep.subr.mxu0 0.0
    %v2431 = vand.u32 %v2066, 4294901760
    %2432 = vmatpush1.msra.mxu0 %v2431
    %2433 = vmatprep.subr.mxu0 0.0
    %v2434 = vand.u32 %v2067, 4294901760
    %2435 = vmatpush1.msra.mxu0 %v2434
    %2436 = vmatprep.subr.mxu0 0.0
    %v2437 = vand.u32 %v2068, 4294901760
    %2438 = vmatpush1.msra.mxu0 %v2437
    %2439 = vmatprep.subr.mxu0 0.0
    %v2440 = vand.u32 %v2069, 4294901760
    %2441 = vmatpush1.msra.mxu0 %v2440
    %2442 = vmatprep.subr.mxu0 0.0
    %v2443 = vand.u32 %v2070, 4294901760
    %2444 = vmatpush1.msra.mxu0 %v2443
    %2445 = vmatprep.subr.mxu0 0.0
    %v2446 = vand.u32 %v2071, 4294901760
    %2447 = vmatpush1.msra.mxu0 %v2446
    %2448 = vmatprep.subr.mxu0 0.0
    %v2449 = vand.u32 %v2072, 4294901760
    %2450 = vmatpush1.msra.mxu0 %v2449
    %2451 = vmatprep.subr.mxu0 0.0
    %v2452 = vand.u32 %v2073, 4294901760
    %2453 = vmatpush1.msra.mxu0 %v2452
    %2454 = vmatprep.subr.mxu0 0.0
    %v2455 = vand.u32 %v2074, 4294901760
    %2456 = vmatpush1.msra.mxu0 %v2455
    %2457 = vmatprep.subr.mxu0 0.0
    %v2458 = vand.u32 %v2075, 4294901760
    %2459 = vmatpush1.msra.mxu0 %v2458
    %2460 = vmatprep.subr.mxu0 0.0
    %v2461 = vand.u32 %v2076, 4294901760
    %2462 = vmatpush1.msra.mxu0 %v2461
    %2463 = vmatprep.subr.mxu0 0.0
    %v2464 = vand.u32 %v2077, 4294901760
    %2465 = vmatpush1.msra.mxu0 %v2464
    %2466 = vmatprep.subr.mxu0 0.0
    %v2467 = vand.u32 %v2078, 4294901760
    %2468 = vmatpush1.msra.mxu0 %v2467
    %2469 = vmatprep.subr.mxu0 0.0
    %v2470 = vand.u32 %v2079, 4294901760
    %2471 = vmatpush1.msra.mxu0 %v2470
    %2472 = vmatprep.subr.mxu0 0.0
    %v2473 = vand.u32 %v2080, 4294901760
    %2474 = vmatpush1.msra.mxu0 %v2473
    %2475 = vmatprep.subr.mxu0 0.0
    %2476 = vmatpush1.msra.mxu0 0.0
    %2477 = vmatprep.subr.mxu0 0.0
    %2478 = vmatpush1.msra.mxu0 0.0
    %2479 = vmatprep.subr.mxu0 0.0
    %2480 = vmatpush1.msra.mxu0 0.0
    %2481 = vmatprep.subr.mxu0 0.0
    %2482 = vmatpush1.msra.mxu0 0.0
    %2483 = vmatprep.subr.mxu0 0.0
    %2484 = vmatpush1.msra.mxu0 0.0
    %2485 = vmatprep.subr.mxu0 0.0
    %2486 = vmatpush1.msra.mxu0 0.0
    %2487 = vmatprep.subr.mxu0 0.0
    %2488 = vmatpush1.msra.mxu0 0.0
    %2489 = vmatprep.subr.mxu0 0.0
    %2490 = vmatpush1.msra.mxu0 0.0
    %2491 = vmatprep.subr.mxu0 0.0
    %2492 = vmatpush1.msra.mxu0 0.0
    %2493 = vmatprep.subr.mxu0 0.0
    %2494 = vmatpush1.msra.mxu0 0.0
    %2495 = vmatprep.subr.mxu0 0.0
    %2496 = vmatpush1.msra.mxu0 0.0
    %2497 = vmatprep.subr.mxu0 0.0
    %2498 = vmatpush1.msra.mxu0 0.0
    %2499 = vmatprep.subr.mxu0 0.0
    %2500 = vmatpush1.msra.mxu0 0.0
    %2501 = vmatprep.subr.mxu0 0.0
    %2502 = vmatpush1.msra.mxu0 0.0
    %2503 = vmatprep.subr.mxu0 0.0
    %2504 = vmatpush1.msra.mxu0 0.0
    %2505 = vmatprep.subr.mxu0 0.0
    %2506 = vmatpush1.msra.mxu0 0.0
    %2507 = vmatprep.mubr.f32.mxu0 0.0
    %v2508 = vand.u32 %v2063, 4294901760
    %v2509 = vsub.f32 %v2063, %v2508
    %v2510 = vand.u32 %v2509, 4294901760
    %2511 = vmatmul.mubr.f32.gmra.mrb[0].mxu0 %v2510
    %v2512 = vpop.f32.mrb[0].mxu0
    %v2513 = vadd.f32 %v2424, %v2512
    %v2514 = vpop.f32.mrb[0].mxu0
    %2515 = vdwg.mxu0
    %2516 = vmatprep.subr.mxu0 0.0
    %v2517 = vand.u32 %v2065, 4294901760
    %v2518 = vsub.f32 %v2065, %v2517
    %v2519 = vand.u32 %v2518, 4294901760
    %2520 = vmatpush1.msra.mxu0 %v2519
    %2521 = vmatprep.subr.mxu0 0.0
    %v2522 = vand.u32 %v2066, 4294901760
    %v2523 = vsub.f32 %v2066, %v2522
    %v2524 = vand.u32 %v2523, 4294901760
    %2525 = vmatpush1.msra.mxu0 %v2524
    %2526 = vmatprep.subr.mxu0 0.0
    %v2527 = vand.u32 %v2067, 4294901760
    %v2528 = vsub.f32 %v2067, %v2527
    %v2529 = vand.u32 %v2528, 4294901760
    %2530 = vmatpush1.msra.mxu0 %v2529
    %2531 = vmatprep.subr.mxu0 0.0
    %v2532 = vand.u32 %v2068, 4294901760
    %v2533 = vsub.f32 %v2068, %v2532
    %v2534 = vand.u32 %v2533, 4294901760
    %2535 = vmatpush1.msra.mxu0 %v2534
    %2536 = vmatprep.subr.mxu0 0.0
    %v2537 = vand.u32 %v2069, 4294901760
    %v2538 = vsub.f32 %v2069, %v2537
    %v2539 = vand.u32 %v2538, 4294901760
    %2540 = vmatpush1.msra.mxu0 %v2539
    %2541 = vmatprep.subr.mxu0 0.0
    %v2542 = vand.u32 %v2070, 4294901760
    %v2543 = vsub.f32 %v2070, %v2542
    %v2544 = vand.u32 %v2543, 4294901760
    %2545 = vmatpush1.msra.mxu0 %v2544
    %2546 = vmatprep.subr.mxu0 0.0
    %v2547 = vand.u32 %v2071, 4294901760
    %v2548 = vsub.f32 %v2071, %v2547
    %v2549 = vand.u32 %v2548, 4294901760
    %2550 = vmatpush1.msra.mxu0 %v2549
    %2551 = vmatprep.subr.mxu0 0.0
    %v2552 = vand.u32 %v2072, 4294901760
    %v2553 = vsub.f32 %v2072, %v2552
    %v2554 = vand.u32 %v2553, 4294901760
    %2555 = vmatpush1.msra.mxu0 %v2554
    %2556 = vmatprep.subr.mxu0 0.0
    %v2557 = vand.u32 %v2073, 4294901760
    %v2558 = vsub.f32 %v2073, %v2557
    %v2559 = vand.u32 %v2558, 4294901760
    %2560 = vmatpush1.msra.mxu0 %v2559
    %2561 = vmatprep.subr.mxu0 0.0
    %v2562 = vand.u32 %v2074, 4294901760
    %v2563 = vsub.f32 %v2074, %v2562
    %v2564 = vand.u32 %v2563, 4294901760
    %2565 = vmatpush1.msra.mxu0 %v2564
    %2566 = vmatprep.subr.mxu0 0.0
    %v2567 = vand.u32 %v2075, 4294901760
    %v2568 = vsub.f32 %v2075, %v2567
    %v2569 = vand.u32 %v2568, 4294901760
    %2570 = vmatpush1.msra.mxu0 %v2569
    %2571 = vmatprep.subr.mxu0 0.0
    %v2572 = vand.u32 %v2076, 4294901760
    %v2573 = vsub.f32 %v2076, %v2572
    %v2574 = vand.u32 %v2573, 4294901760
    %2575 = vmatpush1.msra.mxu0 %v2574
    %2576 = vmatprep.subr.mxu0 0.0
    %v2577 = vand.u32 %v2077, 4294901760
    %v2578 = vsub.f32 %v2077, %v2577
    %v2579 = vand.u32 %v2578, 4294901760
    %2580 = vmatpush1.msra.mxu0 %v2579
    %2581 = vmatprep.subr.mxu0 0.0
    %v2582 = vand.u32 %v2078, 4294901760
    %v2583 = vsub.f32 %v2078, %v2582
    %v2584 = vand.u32 %v2583, 4294901760
    %2585 = vmatpush1.msra.mxu0 %v2584
    %2586 = vmatprep.subr.mxu0 0.0
    %v2587 = vand.u32 %v2079, 4294901760
    %v2588 = vsub.f32 %v2079, %v2587
    %v2589 = vand.u32 %v2588, 4294901760
    %2590 = vmatpush1.msra.mxu0 %v2589
    %2591 = vmatprep.subr.mxu0 0.0
    %v2592 = vand.u32 %v2080, 4294901760
    %v2593 = vsub.f32 %v2080, %v2592
    %v2594 = vand.u32 %v2593, 4294901760
    %2595 = vmatpush1.msra.mxu0 %v2594
    %2596 = vmatprep.subr.mxu0 0.0
    %2597 = vmatpush1.msra.mxu0 0.0
    %2598 = vmatprep.subr.mxu0 0.0
    %2599 = vmatpush1.msra.mxu0 0.0
    %2600 = vmatprep.subr.mxu0 0.0
    %2601 = vmatpush1.msra.mxu0 0.0
    %2602 = vmatprep.subr.mxu0 0.0
    %2603 = vmatpush1.msra.mxu0 0.0
    %2604 = vmatprep.subr.mxu0 0.0
    %2605 = vmatpush1.msra.mxu0 0.0
    %2606 = vmatprep.subr.mxu0 0.0
    %2607 = vmatpush1.msra.mxu0 0.0
    %2608 = vmatprep.subr.mxu0 0.0
    %2609 = vmatpush1.msra.mxu0 0.0
    %2610 = vmatprep.subr.mxu0 0.0
    %2611 = vmatpush1.msra.mxu0 0.0
    %2612 = vmatprep.subr.mxu0 0.0
    %2613 = vmatpush1.msra.mxu0 0.0
    %2614 = vmatprep.subr.mxu0 0.0
    %2615 = vmatpush1.msra.mxu0 0.0
    %2616 = vmatprep.subr.mxu0 0.0
    %2617 = vmatpush1.msra.mxu0 0.0
    %2618 = vmatprep.subr.mxu0 0.0
    %2619 = vmatpush1.msra.mxu0 0.0
    %2620 = vmatprep.subr.mxu0 0.0
    %2621 = vmatpush1.msra.mxu0 0.0
    %2622 = vmatprep.subr.mxu0 0.0
    %2623 = vmatpush1.msra.mxu0 0.0
    %2624 = vmatprep.subr.mxu0 0.0
    %2625 = vmatpush1.msra.mxu0 0.0
    %2626 = vmatprep.subr.mxu0 0.0
    %2627 = vmatpush1.msra.mxu0 0.0
    %2628 = vmatprep.mubr.f32.mxu0 0.0
    %v2629 = vand.u32 %v2063, 4294901760
    %2630 = vmatmul.mubr.f32.gmra.mrb[0].mxu0 %v2629
    %v2631 = vpop.f32.mrb[0].mxu0
    %v2632 = vadd.f32 %v2513, %v2631
    %v2633 = vpop.f32.mrb[0].mxu0
    %2634 = vdwg.mxu0
    %2635 = vmatprep.subr.mxu0 0.0
    %v2636 = vand.u32 %v2065, 4294901760
    %2637 = vmatpush1.msra.mxu0 %v2636
    %2638 = vmatprep.subr.mxu0 0.0
    %v2639 = vand.u32 %v2066, 4294901760
    %2640 = vmatpush1.msra.mxu0 %v2639
    %2641 = vmatprep.subr.mxu0 0.0
    %v2642 = vand.u32 %v2067, 4294901760
    %2643 = vmatpush1.msra.mxu0 %v2642
    %2644 = vmatprep.subr.mxu0 0.0
    %v2645 = vand.u32 %v2068, 4294901760
    %2646 = vmatpush1.msra.mxu0 %v2645
    %2647 = vmatprep.subr.mxu0 0.0
    %v2648 = vand.u32 %v2069, 4294901760
    %2649 = vmatpush1.msra.mxu0 %v2648
    %2650 = vmatprep.subr.mxu0 0.0
    %v2651 = vand.u32 %v2070, 4294901760
    %2652 = vmatpush1.msra.mxu0 %v2651
    %2653 = vmatprep.subr.mxu0 0.0
    %v2654 = vand.u32 %v2071, 4294901760
    %2655 = vmatpush1.msra.mxu0 %v2654
    %2656 = vmatprep.subr.mxu0 0.0
    %v2657 = vand.u32 %v2072, 4294901760
    %2658 = vmatpush1.msra.mxu0 %v2657
    %2659 = vmatprep.subr.mxu0 0.0
    %v2660 = vand.u32 %v2073, 4294901760
    %2661 = vmatpush1.msra.mxu0 %v2660
    %2662 = vmatprep.subr.mxu0 0.0
    %v2663 = vand.u32 %v2074, 4294901760
    %2664 = vmatpush1.msra.mxu0 %v2663
    %2665 = vmatprep.subr.mxu0 0.0
    %v2666 = vand.u32 %v2075, 4294901760
    %2667 = vmatpush1.msra.mxu0 %v2666
    %2668 = vmatprep.subr.mxu0 0.0
    %v2669 = vand.u32 %v2076, 4294901760
    %2670 = vmatpush1.msra.mxu0 %v2669
    %2671 = vmatprep.subr.mxu0 0.0
    %v2672 = vand.u32 %v2077, 4294901760
    %2673 = vmatpush1.msra.mxu0 %v2672
    %2674 = vmatprep.subr.mxu0 0.0
    %v2675 = vand.u32 %v2078, 4294901760
    %2676 = vmatpush1.msra.mxu0 %v2675
    %2677 = vmatprep.subr.mxu0 0.0
    %v2678 = vand.u32 %v2079, 4294901760
    %2679 = vmatpush1.msra.mxu0 %v2678
    %2680 = vmatprep.subr.mxu0 0.0
    %v2681 = vand.u32 %v2080, 4294901760
    %2682 = vmatpush1.msra.mxu0 %v2681
    %2683 = vmatprep.subr.mxu0 0.0
    %2684 = vmatpush1.msra.mxu0 0.0
    %2685 = vmatprep.subr.mxu0 0.0
    %2686 = vmatpush1.msra.mxu0 0.0
    %2687 = vmatprep.subr.mxu0 0.0
    %2688 = vmatpush1.msra.mxu0 0.0
    %2689 = vmatprep.subr.mxu0 0.0
    %2690 = vmatpush1.msra.mxu0 0.0
    %2691 = vmatprep.subr.mxu0 0.0
    %2692 = vmatpush1.msra.mxu0 0.0
    %2693 = vmatprep.subr.mxu0 0.0
    %2694 = vmatpush1.msra.mxu0 0.0
    %2695 = vmatprep.subr.mxu0 0.0
    %2696 = vmatpush1.msra.mxu0 0.0
    %2697 = vmatprep.subr.mxu0 0.0
    %2698 = vmatpush1.msra.mxu0 0.0
    %2699 = vmatprep.subr.mxu0 0.0
    %2700 = vmatpush1.msra.mxu0 0.0
    %2701 = vmatprep.subr.mxu0 0.0
    %2702 = vmatpush1.msra.mxu0 0.0
    %2703 = vmatprep.subr.mxu0 0.0
    %2704 = vmatpush1.msra.mxu0 0.0
    %2705 = vmatprep.subr.mxu0 0.0
    %2706 = vmatpush1.msra.mxu0 0.0
    %2707 = vmatprep.subr.mxu0 0.0
    %2708 = vmatpush1.msra.mxu0 0.0
    %2709 = vmatprep.subr.mxu0 0.0
    %2710 = vmatpush1.msra.mxu0 0.0
    %2711 = vmatprep.subr.mxu0 0.0
    %2712 = vmatpush1.msra.mxu0 0.0
    %2713 = vmatprep.subr.mxu0 0.0
    %2714 = vmatpush1.msra.mxu0 0.0
    %2715 = vmatprep.mubr.f32.mxu0 0.0
    %v2716 = vand.u32 %v2063, 4294901760
    %2717 = vmatmul.mubr.f32.gmra.mrb[0].mxu0 %v2716
    %v2718 = vpop.f32.mrb[0].mxu0
    %v2719 = vadd.f32 %v2632, %v2718
    %v2720 = vpop.f32.mrb[0].mxu0
    %2721 = vdwg.mxu0
    %v2722 = vmul.f32 %v2719, 0.00088388345
    %s2723 = scalar_lea.vmem %s3, 3
    %v2724 = vld [vmem:[%s2723] sm:$0x1]
    %v2726 = vlaneseq
    %v2727 = vshrl.u32 %v2726, 7
    %v2728 = vsub.s32 0, %v2727
    %v2729 = vrot.slane %v2724, %v2728
    %v2731 = vadd.f32 %v2722, %v2729
    %vm2732 = vcmp.ge.f32.partialorder %v2731, 0.0
    %v2733 = vsel %vm2732, 1.4142135, 0.28284273
    %v2734 = vmul.f32 %v2731, %v2733
    %2735 = vst [vmem:[#allocation7] sm:$0xff] %v2734
    // Predicated region
    $region26: #{tpu_custom_call.1} parent=1 // pred_check
      _
    $region27: #{tpu_custom_call.1} parent=1 // pred_check_branch
      %2737 = sbr.rel (0) target = $region29
    $region28: #{tpu_custom_call.1} parent=1 // pred_region
      %s2739 = ssub.s32 128, 128
      %2740 = vsyncadd [#allocation4], %s2739
      %s2742 = sshll.u32 [#allocation7], 4
      %s2743 = int_to_ptr.vmem [resolvable:$true] %s2742
      %2745 = dma.vmem_to_hbm [thread:$0]  %s2743, 128, %s4, [#allocation4]
    $region29: #{tpu_custom_call.1} parent=1 // pred_fallthru
      _
    // Predicated region
    $region30: #{tpu_custom_call.1} parent=1 // pred_check
      _
    $region31: #{tpu_custom_call.1} parent=1 // pred_check_branch
      %2747 = sbr.rel (0) target = $region33
    $region32: #{tpu_custom_call.1} parent=1 // pred_region
      %2748 = dma.done [#allocation4], 128
    $region33: #{tpu_custom_call.1} parent=1 // pred_fallthru
      _
    %2749 = vsyncpa [#allocation3], 1
    %2750 = vsyncpa [#allocation6], 1
    %2751 = vsyncpa [#allocation4], 1

</llo_original>
